<compile_context>
chip_gen: v6e
topology: v6e:2x2x1
jax: 0.10.0
libtpu: 0.0.40
codegen_flags: <defaults>
</compile_context>

<pallas_src>
import functools

import jax
import jax.numpy as jnp
from jax import lax
from jax.experimental import pallas as pl
from jax.experimental.pallas import tpu as pltpu  # noqa: F401

EPS = 1e-12  # F.normalize eps


def _l2normalize(x):
    # x / max(||x||, eps) == x * rsqrt(max(||x||^2, eps^2)); rsqrt -> EUP slot.
    ss = jnp.sum(x * x, axis=-1, keepdims=True)
    return x * lax.rsqrt(jnp.maximum(ss, EPS * EPS))


def _fused_forward_kernel(
        xq_ref, xk_ref, lab_ref, qlab_ref,
        enc_wt_ref, enc_b_ref,
        cls_wt_ref, cls_b_ref,
        lq_ref, qe_wt_ref, qe_b_ref,
        ca_wq_ref, ca_wk_ref, ca_wv_ref, ca_wo_ref,
        fc_w1_ref, fc_b1_ref, fc_w2_ref, fc_b2_ref,
        queue_ref,
        cl_ref, small_ref,
        *, n_batch, n_tokens, n_feat, n_classes, n_queries, n_queue,
        inv_temp, inv_intra_temp, attn_scale, mask_out):
    f32 = jnp.float32
    bf16 = jnp.bfloat16
    N, P, C, L, K = n_batch, n_tokens, n_feat, n_queries, n_queue
    del n_classes  # only used for output packing widths in the wrapper

    # --- encoder (stand-in): per-token Linear; q & k branches share the weight --
    # TODO(synk): base_encoder.extract_feature_person is unspecified; stand-in
    # is a per-token Linear(d_in -> d_features).
    enc_w = enc_wt_ref[...]                                   # (Din, C) bf16
    enc_b = enc_b_ref[...]                                    # (1, C)  f32
    local_q = jnp.dot(xq_ref[...].astype(bf16), enc_w,
                      preferred_element_type=f32) + enc_b     # (N*P, C)
    local_k = jnp.dot(xk_ref[...].astype(bf16), enc_w,
                      preferred_element_type=f32) + enc_b     # (N*P, C)

    # --- token-mean pooling: sublane reduce (no pooling matrix) -----------------
    local_q3 = local_q.reshape(N, P, C)                        # lane dim untouched
    global_q = jnp.mean(local_q3, axis=1)                      # (N, C)
    global_k = jnp.mean(local_k.reshape(N, P, C), axis=1)      # (N, C)

    # --- classification head (cls_frozen=False; clone/detach are value no-ops) --
    logits = (jnp.dot(global_q, cls_wt_ref[...],
                      preferred_element_type=f32) + cls_b_ref[...])     # (N, nc)

    # --- learned queries + queries embedding (shared across batch; not tiled) ---
    # TODO(synk): QueriesEmbedding internals unspecified; stand-in = Linear+ReLU.
    lq = jnp.maximum(
        jnp.dot(lq_ref[...], qe_wt_ref[...], preferred_element_type=f32)
        + qe_b_ref[...], 0.0)                                  # (L, C)
    lq_n = _l2normalize(lq)

    # --- contrastive_intra -------------------------------------------------------
    gq_n = _l2normalize(global_q)
    c1 = jnp.dot(gq_n, lq_n.T, preferred_element_type=f32) * inv_intra_temp  # (N,L)

    # --- single-head cross-attention, batched over N (no Python loop) -----------
    # TODO(synk): CrossAttention internals are unspecified; standard q/k/v/o
    # single-head stand-in.
    q_proj = jnp.dot(lq, ca_wq_ref[...], preferred_element_type=f32)     # (L, C)
    k3 = jnp.dot(local_q, ca_wk_ref[...],
                 preferred_element_type=f32).reshape(N, P, C)            # (N, P, C)
    v3 = jnp.dot(local_q, ca_wv_ref[...],
                 preferred_element_type=f32).reshape(N, P, C)            # (N, P, C)
    qb = jnp.broadcast_to(q_proj[None], (N, L, C))
    s = jnp.einsum('nlc,npc->nlp', qb, k3,
                   preferred_element_type=f32) * attn_scale              # (N, L, P)
    s = s - jnp.max(s, axis=-1, keepdims=True)
    pattn = jnp.exp(s)
    pattn = pattn * pl.reciprocal(jnp.sum(pattn, axis=-1, keepdims=True),
                                  approx=True)
    att = jnp.einsum('nlp,npc->nlc', pattn, v3,
                     preferred_element_type=f32)                         # (N, L, C)
    out = jnp.dot(att.reshape(N * L, C), ca_wo_ref[...],
                  preferred_element_type=f32).reshape(N, L, C)           # (N, L, C)
    c2 = jnp.sum(lq_n[None] * _l2normalize(out), axis=-1) * inv_intra_temp  # (N, L)

    # --- small outputs: one lane-dense packed slab, written once ----------------
    small_ref[...] = jnp.concatenate([logits, c1, c2], axis=-1)          # (N, nc+2L)

    # --- fc_q / fc_k MLP (fc_k == fc_q at init); q & k rows share one pass ------
    g_all = jnp.concatenate([global_q, global_k], axis=0).astype(bf16)   # (2N, C)
    h = jnp.maximum(jnp.dot(g_all, fc_w1_ref[...],
                            preferred_element_type=f32) + fc_b1_ref[...], 0.0)
    qk = (jnp.dot(h.astype(bf16), fc_w2_ref[...],
                  preferred_element_type=f32) + fc_b2_ref[...])          # (2N, C)
    qn = _l2normalize(qk[:N])
    kn = _l2normalize(qk[N:])

    # --- MoCo logits: direct stores (no shift matmul), f32 mask + scale ---------
    l_pos = jnp.sum(qn * kn, axis=-1, keepdims=True)                     # (N, 1)
    l_neg = jnp.dot(qn.astype(bf16), queue_ref[...],
                    preferred_element_type=f32)                          # (N, K)
    if mask_out:
        mask = (lab_ref[...] == qlab_ref[...]).astype(f32)               # (N, K)
        l_neg = l_neg - mask * 1e9
    cl_ref[:, 0:1] = l_pos * inv_temp
    cl_ref[:, pl.ds(1, K)] = l_neg * inv_temp


# -----------------------------------------------------------------------------
# Parameter init (deterministic; mirrors weights_init: Linear ~ N(0, 0.02), bias 0)
# Weights are stored already transposed to (in, out); biases as (1, out).
# Large operands (encoder weight, fc MLP weights, queue) are stored in bf16.
# -----------------------------------------------------------------------------
def init_params(key, d_in, d_features, n_classes, queue_size):
    ks = jax.random.split(key, 11)
    C = d_features
    bf16 = jnp.bfloat16
    p = {}
    # Encoder stand-in (per-token Linear).
    p["enc_wt"] = (0.02 * jax.random.normal(ks[0], (d_in, C), jnp.float32)).astype(bf16)
    p["enc_b"] = jnp.zeros((1, C), jnp.float32)
    # fc_q (fc_k copies fc_q at init / EMA of equal params).
    p["fcq_w1t"] = (0.02 * jax.random.normal(ks[1], (C, C), jnp.float32)).astype(bf16)
    p["fcq_b1"] = jnp.zeros((1, C), jnp.float32)
    p["fcq_w2t"] = (0.02 * jax.random.normal(ks[2], (C, C), jnp.float32)).astype(bf16)
    p["fcq_b2"] = jnp.zeros((1, C), jnp.float32)
    # cls_head (re-initialized by weights_init -> N(0, 0.02), bias 0).
    p["cls_wt"] = 0.02 * jax.random.normal(ks[3], (C, n_classes), jnp.float32)
    p["cls_b"] = jnp.zeros((1, n_classes), jnp.float32)
    # learned queries (Embedding: untouched by weights_init -> N(0, 0.01)).
    p["learned_queries"] = 0.01 * jax.random.normal(ks[4], (n_classes, C), jnp.float32)
    # QueriesEmbedding stand-in.
    p["qe_wt"] = 0.02 * jax.random.normal(ks[5], (C, C), jnp.float32)
    p["qe_b"] = jnp.zeros((1, C), jnp.float32)
    # CrossAttention projections.
    p["ca_wq_t"] = 0.02 * jax.random.normal(ks[6], (C, C), jnp.float32)
    p["ca_wk_t"] = 0.02 * jax.random.normal(ks[7], (C, C), jnp.float32)
    p["ca_wv_t"] = 0.02 * jax.random.normal(ks[8], (C, C), jnp.float32)
    p["ca_wo_t"] = 0.02 * jax.random.normal(ks[9], (C, C), jnp.float32)
    # MoCo queue: randn normalized along dim 0 (f32), stored bf16; labels = -1.
    queue = jax.random.normal(ks[10], (C, queue_size), jnp.float32)
    queue = queue / jnp.maximum(
        jnp.sqrt(jnp.sum(queue * queue, axis=0, keepdims=True)), EPS)
    p["queue"] = queue.astype(bf16)
    p["queue_label"] = jnp.full((1, queue_size), -1, jnp.int32)
    return p


# -----------------------------------------------------------------------------
# Model.forward (NPNM=False path, with im_k / labels given) -- one fused kernel.
# -----------------------------------------------------------------------------
@functools.partial(jax.jit, static_argnames=("T", "intra_T", "mask_out"))
def forward(params, im_q, im_k, labels, *, T=0.07, intra_T=0.07, mask_out=True):
    N, P, Din = im_q.shape
    C = params["enc_wt"].shape[1]
    nc = params["cls_wt"].shape[1]
    nq = params["learned_queries"].shape[0]
    K = params["queue"].shape[1]

    # Free reshapes (no concatenate -> no extra HBM copy of the input batch).
    xq = im_q.reshape(N * P, Din)
    xk = im_k.reshape(N * P, Din)
    labels2d = labels.reshape(N, 1).astype(jnp.int32)

    kernel = functools.partial(
        _fused_forward_kernel,
        n_batch=N, n_tokens=P, n_feat=C, n_classes=nc, n_queries=nq, n_queue=K,
        inv_temp=1.0 / T, inv_intra_temp=1.0 / intra_T,
        attn_scale=1.0 / (C ** 0.5), mask_out=mask_out)

    cl_logits, small = pl.pallas_call(
        kernel,
        out_shape=(
            jax.ShapeDtypeStruct((N, 1 + K), jnp.float32),
            jax.ShapeDtypeStruct((N, nc + 2 * nq), jnp.float32),
        ),
    )(xq, xk, labels2d, params["queue_label"],
      params["enc_wt"], params["enc_b"],
      params["cls_wt"], params["cls_b"],
      params["learned_queries"], params["qe_wt"], params["qe_b"],
      params["ca_wq_t"], params["ca_wk_t"], params["ca_wv_t"], params["ca_wo_t"],
      params["fcq_w1t"], params["fcq_b1"], params["fcq_w2t"], params["fcq_b2"],
      params["queue"])

    logits = small[:, :nc]
    logits_c1 = small[:, nc:nc + nq]
    logits_c2 = small[:, nc + nq:]
    cl_labels = jnp.zeros((N,), jnp.int32)   # NPNM=False path
    # TODO(synk): stateful _dequeue_and_enqueue (queue/queue_ptr mutation), the
    # momentum update of encoder_k/fc_k, and the NPNM=True top-k/scatter branch
    # are not reproduced (side effects / alternative branch); fc_k/encoder_k use
    # the q-branch weights, which is exact only at initialization.
    return cl_logits, cl_labels, logits, logits_c1, logits_c2


if __name__ == "__main__":
    N, P, D_IN = 2, 4, 64         # batch, persons/local tokens, raw input dim
    C, N_CLASSES, K = 32, 8, 128  # d_features, n_classes, queue size (K % N == 0)

    key = jax.random.PRNGKey(0)
    k_params, k_q, k_k, k_lab = jax.random.split(key, 4)
    params = init_params(k_params, D_IN, C, N_CLASSES, K)

    im_q = jax.random.normal(k_q, (N, P, D_IN), jnp.float32)
    im_k = jax.random.normal(k_k, (N, P, D_IN), jnp.float32)
    labels = jax.random.randint(k_lab, (N,), 0, N_CLASSES, jnp.int32)

    outs = forward(params, im_q, im_k, labels)
    outs = jax.block_until_ready(outs)

    cl_logits, cl_labels, logits, logits_c1, logits_c2 = outs
    assert cl_logits.shape == (N, 1 + K)
    assert cl_labels.shape == (N,)
    assert logits.shape == (N, N_CLASSES)
    assert logits_c1.shape == (N, N_CLASSES)
    assert logits_c2.shape == (N, N_CLASSES)
    print("KERNEL_OK")
</pallas_src>

<mosaic_0001>
module attributes {stable_mosaic.version = 11 : i64} {
  func.func @_fused_forward_kernel(%arg0: memref<8x64xf32, #tpu.memory_space<vmem>>, %arg1: memref<8x64xf32, #tpu.memory_space<vmem>>, %arg2: memref<2x1xi32, #tpu.memory_space<vmem>>, %arg3: memref<1x128xi32, #tpu.memory_space<vmem>>, %arg4: memref<64x32xbf16, #tpu.memory_space<vmem>>, %arg5: memref<1x32xf32, #tpu.memory_space<vmem>>, %arg6: memref<32x8xf32, #tpu.memory_space<vmem>>, %arg7: memref<1x8xf32, #tpu.memory_space<vmem>>, %arg8: memref<8x32xf32, #tpu.memory_space<vmem>>, %arg9: memref<32x32xf32, #tpu.memory_space<vmem>>, %arg10: memref<1x32xf32, #tpu.memory_space<vmem>>, %arg11: memref<32x32xf32, #tpu.memory_space<vmem>>, %arg12: memref<32x32xf32, #tpu.memory_space<vmem>>, %arg13: memref<32x32xf32, #tpu.memory_space<vmem>>, %arg14: memref<32x32xf32, #tpu.memory_space<vmem>>, %arg15: memref<32x32xbf16, #tpu.memory_space<vmem>>, %arg16: memref<1x32xf32, #tpu.memory_space<vmem>>, %arg17: memref<32x32xbf16, #tpu.memory_space<vmem>>, %arg18: memref<1x32xf32, #tpu.memory_space<vmem>>, %arg19: memref<32x128xbf16, #tpu.memory_space<vmem>>, %arg20: memref<2x129xf32, #tpu.memory_space<vmem>>, %arg21: memref<2x24xf32, #tpu.memory_space<vmem>>) attributes {dimension_semantics = [], scalar_prefetch = 0 : i64, scratch_operands = 0 : i64, tpu.core_type = #tpu.core_type<tc>} {
    %c0 = arith.constant 0 : index
    %c0_0 = arith.constant 0 : index
    %0 = vector.load %arg4[%c0, %c0_0] : memref<64x32xbf16, #tpu.memory_space<vmem>>, vector<64x32xbf16>
    %c0_1 = arith.constant 0 : index
    %c0_2 = arith.constant 0 : index
    %1 = vector.load %arg5[%c0_1, %c0_2] : memref<1x32xf32, #tpu.memory_space<vmem>>, vector<1x32xf32>
    %c0_3 = arith.constant 0 : index
    %c0_4 = arith.constant 0 : index
    %2 = vector.load %arg0[%c0_3, %c0_4] : memref<8x64xf32, #tpu.memory_space<vmem>>, vector<8x64xf32>
    %3 = arith.truncf %2 : vector<8x64xf32> to vector<8x64xbf16>
    %cst = arith.constant dense<0.000000e+00> : vector<8x32xf32>
    %4 = tpu.matmul %3, %0, %cst {dimension_numbers = #tpu.dot_dimension_numbers<[1], [0], [0], [1], [0, 0, 1, 1], [], []>} : vector<8x64xbf16>, vector<64x32xbf16>, vector<8x32xf32> -> vector<8x32xf32>
    %5 = vector.broadcast %1 : vector<1x32xf32> to vector<8x32xf32>
    %6 = arith.addf %4, %5 : vector<8x32xf32>
    %c0_5 = arith.constant 0 : index
    %c0_6 = arith.constant 0 : index
    %7 = vector.load %arg1[%c0_5, %c0_6] : memref<8x64xf32, #tpu.memory_space<vmem>>, vector<8x64xf32>
    %8 = arith.truncf %7 : vector<8x64xf32> to vector<8x64xbf16>
    %cst_7 = arith.constant dense<0.000000e+00> : vector<8x32xf32>
    %9 = tpu.matmul %8, %0, %cst_7 {dimension_numbers = #tpu.dot_dimension_numbers<[1], [0], [0], [1], [0, 0, 1, 1], [], []>} : vector<8x64xbf16>, vector<64x32xbf16>, vector<8x32xf32> -> vector<8x32xf32>
    %10 = vector.broadcast %1 : vector<1x32xf32> to vector<8x32xf32>
    %11 = arith.addf %9, %10 : vector<8x32xf32>
    %12 = vector.shape_cast %6 : vector<8x32xf32> to vector<2x4x32xf32>
    %cst_8 = arith.constant dense<0.000000e+00> : vector<2x32xf32>
    %13 = vector.multi_reduction <add>, %12, %cst_8 [1] : vector<2x4x32xf32> to vector<2x32xf32>
    %cst_9 = arith.constant 4.000000e+00 : f32
    %14 = vector.broadcast %cst_9 : f32 to vector<2x32xf32>
    %15 = arith.divf %13, %14 : vector<2x32xf32>
    %16 = vector.shape_cast %11 : vector<8x32xf32> to vector<2x4x32xf32>
    %cst_10 = arith.constant dense<0.000000e+00> : vector<2x32xf32>
    %17 = vector.multi_reduction <add>, %16, %cst_10 [1] : vector<2x4x32xf32> to vector<2x32xf32>
    %cst_11 = arith.constant 4.000000e+00 : f32
    %18 = vector.broadcast %cst_11 : f32 to vector<2x32xf32>
    %19 = arith.divf %17, %18 : vector<2x32xf32>
    %c0_12 = arith.constant 0 : index
    %c0_13 = arith.constant 0 : index
    %20 = vector.load %arg6[%c0_12, %c0_13] : memref<32x8xf32, #tpu.memory_space<vmem>>, vector<32x8xf32>
    %cst_14 = arith.constant dense<0.000000e+00> : vector<2x8xf32>
    %21 = tpu.matmul %15, %20, %cst_14 {dimension_numbers = #tpu.dot_dimension_numbers<[1], [0], [0], [1], [0, 0, 1, 1], [], []>} : vector<2x32xf32>, vector<32x8xf32>, vector<2x8xf32> -> vector<2x8xf32>
    %c0_15 = arith.constant 0 : index
    %c0_16 = arith.constant 0 : index
    %22 = vector.load %arg7[%c0_15, %c0_16] : memref<1x8xf32, #tpu.memory_space<vmem>>, vector<1x8xf32>
    %23 = vector.broadcast %22 : vector<1x8xf32> to vector<2x8xf32>
    %24 = arith.addf %21, %23 : vector<2x8xf32>
    %c0_17 = arith.constant 0 : index
    %c0_18 = arith.constant 0 : index
    %25 = vector.load %arg8[%c0_17, %c0_18] : memref<8x32xf32, #tpu.memory_space<vmem>>, vector<8x32xf32>
    %c0_19 = arith.constant 0 : index
    %c0_20 = arith.constant 0 : index
    %26 = vector.load %arg9[%c0_19, %c0_20] : memref<32x32xf32, #tpu.memory_space<vmem>>, vector<32x32xf32>
    %cst_21 = arith.constant dense<0.000000e+00> : vector<8x32xf32>
    %27 = tpu.matmul %25, %26, %cst_21 {dimension_numbers = #tpu.dot_dimension_numbers<[1], [0], [0], [1], [0, 0, 1, 1], [], []>} : vector<8x32xf32>, vector<32x32xf32>, vector<8x32xf32> -> vector<8x32xf32>
    %c0_22 = arith.constant 0 : index
    %c0_23 = arith.constant 0 : index
    %28 = vector.load %arg10[%c0_22, %c0_23] : memref<1x32xf32, #tpu.memory_space<vmem>>, vector<1x32xf32>
    %29 = vector.broadcast %28 : vector<1x32xf32> to vector<8x32xf32>
    %30 = arith.addf %27, %29 : vector<8x32xf32>
    %cst_24 = arith.constant 0.000000e+00 : f32
    %31 = vector.broadcast %cst_24 : f32 to vector<8x32xf32>
    %32 = arith.maximumf %30, %31 : vector<8x32xf32>
    %33 = arith.mulf %32, %32 : vector<8x32xf32>
    %cst_25 = arith.constant dense<0.000000e+00> : vector<8xf32>
    %34 = vector.multi_reduction <add>, %33, %cst_25 [1] : vector<8x32xf32> to vector<8xf32>
    %35 = vector.shape_cast %34 : vector<8xf32> to vector<8x1xf32>
    %cst_26 = arith.constant 1.000000e-24 : f32
    %36 = vector.broadcast %cst_26 : f32 to vector<8x1xf32>
    %37 = arith.maximumf %35, %36 : vector<8x1xf32>
    %38 = math.rsqrt %37 : vector<8x1xf32>
    %39 = vector.broadcast %38 : vector<8x1xf32> to vector<8x32xf32>
    %40 = arith.mulf %32, %39 : vector<8x32xf32>
    %41 = arith.mulf %15, %15 : vector<2x32xf32>
    %cst_27 = arith.constant dense<0.000000e+00> : vector<2xf32>
    %42 = vector.multi_reduction <add>, %41, %cst_27 [1] : vector<2x32xf32> to vector<2xf32>
    %43 = vector.shape_cast %42 : vector<2xf32> to vector<2x1xf32>
    %cst_28 = arith.constant 1.000000e-24 : f32
    %44 = vector.broadcast %cst_28 : f32 to vector<2x1xf32>
    %45 = arith.maximumf %43, %44 : vector<2x1xf32>
    %46 = math.rsqrt %45 : vector<2x1xf32>
    %47 = vector.broadcast %46 : vector<2x1xf32> to vector<2x32xf32>
    %48 = arith.mulf %15, %47 : vector<2x32xf32>
    %49 = tpu.transpose %40, [1, 0] : vector<8x32xf32> -> vector<32x8xf32>
    %cst_29 = arith.constant dense<0.000000e+00> : vector<2x8xf32>
    %50 = tpu.matmul %48, %49, %cst_29 {dimension_numbers = #tpu.dot_dimension_numbers<[1], [0], [0], [1], [0, 0, 1, 1], [], []>} : vector<2x32xf32>, vector<32x8xf32>, vector<2x8xf32> -> vector<2x8xf32>
    %cst_30 = arith.constant 14.2857141 : f32
    %51 = vector.broadcast %cst_30 : f32 to vector<2x8xf32>
    %52 = arith.mulf %50, %51 : vector<2x8xf32>
    %c0_31 = arith.constant 0 : index
    %c0_32 = arith.constant 0 : index
    %53 = vector.load %arg11[%c0_31, %c0_32] : memref<32x32xf32, #tpu.memory_space<vmem>>, vector<32x32xf32>
    %cst_33 = arith.constant dense<0.000000e+00> : vector<8x32xf32>
    %54 = tpu.matmul %32, %53, %cst_33 {dimension_numbers = #tpu.dot_dimension_numbers<[1], [0], [0], [1], [0, 0, 1, 1], [], []>} : vector<8x32xf32>, vector<32x32xf32>, vector<8x32xf32> -> vector<8x32xf32>
    %c0_34 = arith.constant 0 : index
    %c0_35 = arith.constant 0 : index
    %55 = vector.load %arg12[%c0_34, %c0_35] : memref<32x32xf32, #tpu.memory_space<vmem>>, vector<32x32xf32>
    %cst_36 = arith.constant dense<0.000000e+00> : vector<8x32xf32>
    %56 = tpu.matmul %6, %55, %cst_36 {dimension_numbers = #tpu.dot_dimension_numbers<[1], [0], [0], [1], [0, 0, 1, 1], [], []>} : vector<8x32xf32>, vector<32x32xf32>, vector<8x32xf32> -> vector<8x32xf32>
    %57 = vector.shape_cast %56 : vector<8x32xf32> to vector<2x4x32xf32>
    %c0_37 = arith.constant 0 : index
    %c0_38 = arith.constant 0 : index
    %58 = vector.load %arg13[%c0_37, %c0_38] : memref<32x32xf32, #tpu.memory_space<vmem>>, vector<32x32xf32>
    %cst_39 = arith.constant dense<0.000000e+00> : vector<8x32xf32>
    %59 = tpu.matmul %6, %58, %cst_39 {dimension_numbers = #tpu.dot_dimension_numbers<[1], [0], [0], [1], [0, 0, 1, 1], [], []>} : vector<8x32xf32>, vector<32x32xf32>, vector<8x32xf32> -> vector<8x32xf32>
    %60 = vector.shape_cast %59 : vector<8x32xf32> to vector<2x4x32xf32>
    %61 = vector.shape_cast %54 : vector<8x32xf32> to vector<1x8x32xf32>
    %62 = vector.shape_cast %61 : vector<1x8x32xf32> to vector<1x8x32xf32>
    %63 = vector.broadcast %62 : vector<1x8x32xf32> to vector<2x8x32xf32>
    "tpu.trace_start"() <{level = 10 : i32, message = "nlc,npc->nlp"}> : () -> ()
    %cst_40 = arith.constant dense<0.000000e+00> : vector<2x8x4xf32>
    %64 = tpu.matmul %63, %57, %cst_40 {dimension_numbers = #tpu.dot_dimension_numbers<[2], [2], [1], [1], [0, 0, 0, 1, 1, 1], [0], [0]>} : vector<2x8x32xf32>, vector<2x4x32xf32>, vector<2x8x4xf32> -> vector<2x8x4xf32>
    "tpu.trace_stop"() : () -> ()
    %cst_41 = arith.constant 0.176776692 : f32
    %65 = vector.broadcast %cst_41 : f32 to vector<2x8x4xf32>
    %66 = arith.mulf %64, %65 : vector<2x8x4xf32>
    %cst_42 = arith.constant dense<0xFF800000> : vector<2x8xf32>
    %67 = vector.multi_reduction <maximumf>, %66, %cst_42 [2] : vector<2x8x4xf32> to vector<2x8xf32>
    %68 = vector.shape_cast %67 : vector<2x8xf32> to vector<2x8x1xf32>
    %69 = vector.broadcast %68 : vector<2x8x1xf32> to vector<2x8x4xf32>
    %70 = arith.subf %66, %69 : vector<2x8x4xf32>
    %71 = math.exp %70 : vector<2x8x4xf32>
    %cst_43 = arith.constant dense<0.000000e+00> : vector<2x8xf32>
    %72 = vector.multi_reduction <add>, %71, %cst_43 [2] : vector<2x8x4xf32> to vector<2x8xf32>
    %73 = vector.shape_cast %72 : vector<2x8xf32> to vector<2x8x1xf32>
    %74 = tpu.reciprocal %73 {approx = true} : vector<2x8x1xf32> -> vector<2x8x1xf32>
    %75 = vector.broadcast %74 : vector<2x8x1xf32> to vector<2x8x4xf32>
    %76 = arith.mulf %71, %75 : vector<2x8x4xf32>
    "tpu.trace_start"() <{level = 10 : i32, message = "nlp,npc->nlc"}> : () -> ()
    %cst_44 = arith.constant dense<0.000000e+00> : vector<2x8x32xf32>
    %77 = tpu.matmul %76, %60, %cst_44 {dimension_numbers = #tpu.dot_dimension_numbers<[2], [1], [1], [2], [0, 0, 0, 1, 1, 2], [0], [0]>} : vector<2x8x4xf32>, vector<2x4x32xf32>, vector<2x8x32xf32> -> vector<2x8x32xf32>
    "tpu.trace_stop"() : () -> ()
    %78 = vector.shape_cast %77 : vector<2x8x32xf32> to vector<16x32xf32>
    %c0_45 = arith.constant 0 : index
    %c0_46 = arith.constant 0 : index
    %79 = vector.load %arg14[%c0_45, %c0_46] : memref<32x32xf32, #tpu.memory_space<vmem>>, vector<32x32xf32>
    %cst_47 = arith.constant dense<0.000000e+00> : vector<16x32xf32>
    %80 = tpu.matmul %78, %79, %cst_47 {dimension_numbers = #tpu.dot_dimension_numbers<[1], [0], [0], [1], [0, 0, 1, 1], [], []>} : vector<16x32xf32>, vector<32x32xf32>, vector<16x32xf32> -> vector<16x32xf32>
    %81 = vector.shape_cast %80 : vector<16x32xf32> to vector<2x8x32xf32>
    %82 = vector.shape_cast %40 : vector<8x32xf32> to vector<1x8x32xf32>
    %83 = arith.mulf %81, %81 : vector<2x8x32xf32>
    %cst_48 = arith.constant dense<0.000000e+00> : vector<2x8xf32>
    %84 = vector.multi_reduction <add>, %83, %cst_48 [2] : vector<2x8x32xf32> to vector<2x8xf32>
    %85 = vector.shape_cast %84 : vector<2x8xf32> to vector<2x8x1xf32>
    %cst_49 = arith.constant 1.000000e-24 : f32
    %86 = vector.broadcast %cst_49 : f32 to vector<2x8x1xf32>
    %87 = arith.maximumf %85, %86 : vector<2x8x1xf32>
    %88 = math.rsqrt %87 : vector<2x8x1xf32>
    %89 = vector.broadcast %88 : vector<2x8x1xf32> to vector<2x8x32xf32>
    %90 = arith.mulf %81, %89 : vector<2x8x32xf32>
    %91 = vector.broadcast %82 : vector<1x8x32xf32> to vector<2x8x32xf32>
    %92 = arith.mulf %91, %90 : vector<2x8x32xf32>
    %cst_50 = arith.constant dense<0.000000e+00> : vector<2x8xf32>
    %93 = vector.multi_reduction <add>, %92, %cst_50 [2] : vector<2x8x32xf32> to vector<2x8xf32>
    %cst_51 = arith.constant 14.2857141 : f32
    %94 = vector.broadcast %cst_51 : f32 to vector<2x8xf32>
    %95 = arith.mulf %93, %94 : vector<2x8xf32>
    %96 = tpu.concatenate %24, %52, %95 in 1 : vector<2x8xf32>, vector<2x8xf32>, vector<2x8xf32> -> vector<2x24xf32>
    %c0_52 = arith.constant 0 : index
    %c0_53 = arith.constant 0 : index
    %97 = vector.load %arg21[%c0_52, %c0_53] : memref<2x24xf32, #tpu.memory_space<vmem>>, vector<2x24xf32>
    tpu.vector_store %arg21[%c0_52, %c0_53], %96 {strides = array<i32>} : memref<2x24xf32, #tpu.memory_space<vmem>>, vector<2x24xf32>,
    %98 = tpu.concatenate %15, %19 in 0 : vector<2x32xf32>, vector<2x32xf32> -> vector<4x32xf32>
    %99 = arith.truncf %98 : vector<4x32xf32> to vector<4x32xbf16>
    %c0_54 = arith.constant 0 : index
    %c0_55 = arith.constant 0 : index
    %100 = vector.load %arg15[%c0_54, %c0_55] : memref<32x32xbf16, #tpu.memory_space<vmem>>, vector<32x32xbf16>
    %cst_56 = arith.constant dense<0.000000e+00> : vector<4x32xf32>
    %101 = tpu.matmul %99, %100, %cst_56 {dimension_numbers = #tpu.dot_dimension_numbers<[1], [0], [0], [1], [0, 0, 1, 1], [], []>} : vector<4x32xbf16>, vector<32x32xbf16>, vector<4x32xf32> -> vector<4x32xf32>
    %c0_57 = arith.constant 0 : index
    %c0_58 = arith.constant 0 : index
    %102 = vector.load %arg16[%c0_57, %c0_58] : memref<1x32xf32, #tpu.memory_space<vmem>>, vector<1x32xf32>
    %103 = vector.broadcast %102 : vector<1x32xf32> to vector<4x32xf32>
    %104 = arith.addf %101, %103 : vector<4x32xf32>
    %cst_59 = arith.constant 0.000000e+00 : f32
    %105 = vector.broadcast %cst_59 : f32 to vector<4x32xf32>
    %106 = arith.maximumf %104, %105 : vector<4x32xf32>
    %107 = arith.truncf %106 : vector<4x32xf32> to vector<4x32xbf16>
    %c0_60 = arith.constant 0 : index
    %c0_61 = arith.constant 0 : index
    %108 = vector.load %arg17[%c0_60, %c0_61] : memref<32x32xbf16, #tpu.memory_space<vmem>>, vector<32x32xbf16>
    %cst_62 = arith.constant dense<0.000000e+00> : vector<4x32xf32>
    %109 = tpu.matmul %107, %108, %cst_62 {dimension_numbers = #tpu.dot_dimension_numbers<[1], [0], [0], [1], [0, 0, 1, 1], [], []>} : vector<4x32xbf16>, vector<32x32xbf16>, vector<4x32xf32> -> vector<4x32xf32>
    %c0_63 = arith.constant 0 : index
    %c0_64 = arith.constant 0 : index
    %110 = vector.load %arg18[%c0_63, %c0_64] : memref<1x32xf32, #tpu.memory_space<vmem>>, vector<1x32xf32>
    %111 = vector.broadcast %110 : vector<1x32xf32> to vector<4x32xf32>
    %112 = arith.addf %109, %111 : vector<4x32xf32>
    %113 = vector.extract_strided_slice %112 {offsets = [0, 0], sizes = [2, 32], strides = [1, 1]} : vector<4x32xf32> to vector<2x32xf32>
    %114 = arith.mulf %113, %113 : vector<2x32xf32>
    %cst_65 = arith.constant dense<0.000000e+00> : vector<2xf32>
    %115 = vector.multi_reduction <add>, %114, %cst_65 [1] : vector<2x32xf32> to vector<2xf32>
    %116 = vector.shape_cast %115 : vector<2xf32> to vector<2x1xf32>
    %cst_66 = arith.constant 1.000000e-24 : f32
    %117 = vector.broadcast %cst_66 : f32 to vector<2x1xf32>
    %118 = arith.maximumf %116, %117 : vector<2x1xf32>
    %119 = math.rsqrt %118 : vector<2x1xf32>
    %120 = vector.broadcast %119 : vector<2x1xf32> to vector<2x32xf32>
    %121 = arith.mulf %113, %120 : vector<2x32xf32>
    %122 = vector.extract_strided_slice %112 {offsets = [2, 0], sizes = [2, 32], strides = [1, 1]} : vector<4x32xf32> to vector<2x32xf32>
    %123 = arith.mulf %122, %122 : vector<2x32xf32>
    %cst_67 = arith.constant dense<0.000000e+00> : vector<2xf32>
    %124 = vector.multi_reduction <add>, %123, %cst_67 [1] : vector<2x32xf32> to vector<2xf32>
    %125 = vector.shape_cast %124 : vector<2xf32> to vector<2x1xf32>
    %cst_68 = arith.constant 1.000000e-24 : f32
    %126 = vector.broadcast %cst_68 : f32 to vector<2x1xf32>
    %127 = arith.maximumf %125, %126 : vector<2x1xf32>
    %128 = math.rsqrt %127 : vector<2x1xf32>
    %129 = vector.broadcast %128 : vector<2x1xf32> to vector<2x32xf32>
    %130 = arith.mulf %122, %129 : vector<2x32xf32>
    %131 = arith.mulf %121, %130 : vector<2x32xf32>
    %cst_69 = arith.constant dense<0.000000e+00> : vector<2xf32>
    %132 = vector.multi_reduction <add>, %131, %cst_69 [1] : vector<2x32xf32> to vector<2xf32>
    %133 = vector.shape_cast %132 : vector<2xf32> to vector<2x1xf32>
    %134 = arith.truncf %121 : vector<2x32xf32> to vector<2x32xbf16>
    %c0_70 = arith.constant 0 : index
    %c0_71 = arith.constant 0 : index
    %135 = vector.load %arg19[%c0_70, %c0_71] : memref<32x128xbf16, #tpu.memory_space<vmem>>, vector<32x128xbf16>
    %cst_72 = arith.constant dense<0.000000e+00> : vector<2x128xf32>
    %136 = tpu.matmul %134, %135, %cst_72 {dimension_numbers = #tpu.dot_dimension_numbers<[1], [0], [0], [1], [0, 0, 1, 1], [], []>} : vector<2x32xbf16>, vector<32x128xbf16>, vector<2x128xf32> -> vector<2x128xf32>
    %c0_73 = arith.constant 0 : index
    %c0_74 = arith.constant 0 : index
    %137 = vector.load %arg2[%c0_73, %c0_74] : memref<2x1xi32, #tpu.memory_space<vmem>>, vector<2x1xi32>
    %c0_75 = arith.constant 0 : index
    %c0_76 = arith.constant 0 : index
    %138 = vector.load %arg3[%c0_75, %c0_76] : memref<1x128xi32, #tpu.memory_space<vmem>>, vector<1x128xi32>
    %139 = vector.broadcast %137 : vector<2x1xi32> to vector<2x128xi32>
    %140 = vector.broadcast %138 : vector<1x128xi32> to vector<2x128xi32>
    %141 = arith.cmpi eq, %139, %140 : vector<2x128xi32>
    %142 = arith.extui %141 : vector<2x128xi1> to vector<2x128xi32>
    %143 = arith.sitofp %142 : vector<2x128xi32> to vector<2x128xf32>
    %cst_77 = arith.constant 1.000000e+09 : f32
    %144 = vector.broadcast %cst_77 : f32 to vector<2x128xf32>
    %145 = arith.mulf %143, %144 : vector<2x128xf32>
    %146 = arith.subf %136, %145 : vector<2x128xf32>
    %cst_78 = arith.constant 14.2857141 : f32
    %147 = vector.broadcast %cst_78 : f32 to vector<2x1xf32>
    %148 = arith.mulf %133, %147 : vector<2x1xf32>
    %c0_79 = arith.constant 0 : index
    %c0_80 = arith.constant 0 : index
    %149 = vector.load %arg20[%c0_79, %c0_80] : memref<2x129xf32, #tpu.memory_space<vmem>>, vector<2x1xf32>
    tpu.vector_store %arg20[%c0_79, %c0_80], %148 {strides = array<i32>} : memref<2x129xf32, #tpu.memory_space<vmem>>, vector<2x1xf32>,
    %cst_81 = arith.constant 14.2857141 : f32
    %150 = vector.broadcast %cst_81 : f32 to vector<2x128xf32>
    %151 = arith.mulf %146, %150 : vector<2x128xf32>
    %c0_82 = arith.constant 0 : index
    %c1 = arith.constant 1 : index
    %152 = vector.load %arg20[%c0_82, %c1] : memref<2x129xf32, #tpu.memory_space<vmem>>, vector<2x128xf32>
    tpu.vector_store %arg20[%c0_82, %c1], %151 {strides = array<i32>} : memref<2x129xf32, #tpu.memory_space<vmem>>, vector<2x128xf32>,
    return
  }
}

</mosaic_0001>

<llo_original>
// kernel: forward.1
$region0: #{forward.1}
  #allocation0 [shape = 'u32[]', space=smem, size = 0x4, offset = 0x4, fixed_abs, tag = 'smem constant byte address 0x4 - core index']
  #allocation1 [shape = 'u32[144,128]{1,0:T(1,128)}', space=vmem, size = 0x12000, scoped, tag = 'internal scratch']
  %s0 = inlined_call_operand.vmem [shape: f32[8,64], index: 0, kind: input, shape index: {}]
  %s1 = inlined_call_operand.hbm [shape: f32[8,64], index: 1, kind: input, shape index: {}]
  %s2 = inlined_call_operand.vmem [shape: s32[2,1], index: 2, kind: input, shape index: {}]
  %s3 = inlined_call_operand.hbm [shape: s32[1,128], index: 3, kind: input, shape index: {}]
  %s4 = inlined_call_operand.vmem [shape: bf16[64,32], index: 4, kind: input, shape index: {}]
  %s5 = inlined_call_operand.hbm [shape: f32[1,32], index: 5, kind: input, shape index: {}]
  %s6 = inlined_call_operand.vmem [shape: f32[32,8], index: 6, kind: input, shape index: {}]
  %s7 = inlined_call_operand.hbm [shape: f32[1,8], index: 7, kind: input, shape index: {}]
  %s8 = inlined_call_operand.hbm [shape: f32[8,32], index: 8, kind: input, shape index: {}]
  %s9 = inlined_call_operand.vmem [shape: f32[32,32], index: 9, kind: input, shape index: {}]
  %s10 = inlined_call_operand.hbm [shape: f32[1,32], index: 10, kind: input, shape index: {}]
  %s11 = inlined_call_operand.vmem [shape: f32[32,32], index: 11, kind: input, shape index: {}]
  %s12 = inlined_call_operand.vmem [shape: f32[32,32], index: 12, kind: input, shape index: {}]
  %s13 = inlined_call_operand.hbm [shape: f32[32,32], index: 13, kind: input, shape index: {}]
  %s14 = inlined_call_operand.hbm [shape: f32[32,32], index: 14, kind: input, shape index: {}]
  %s15 = inlined_call_operand.hbm [shape: bf16[32,32], index: 15, kind: input, shape index: {}]
  %s16 = inlined_call_operand.hbm [shape: f32[1,32], index: 16, kind: input, shape index: {}]
  %s17 = inlined_call_operand.hbm [shape: bf16[32,32], index: 17, kind: input, shape index: {}]
  %s18 = inlined_call_operand.hbm [shape: f32[1,32], index: 18, kind: input, shape index: {}]
  %s19 = inlined_call_operand.hbm [shape: bf16[32,128], index: 19, kind: input, shape index: {}]
  %s20 = inlined_call_operand.hbm [shape: f32[2,129], index: 20, kind: output, shape index: {0}]
  %s21 = inlined_call_operand.vmem [shape: f32[2,24], index: 21, kind: output, shape index: {1}]
  %22 = xla_tuple %s20, %s21
  %s23 = sld [smem:[#allocation0]]
  $region150: #{forward.1} parent=0
    _
  %s25 = ssub.s32 1, %s23
  %s26 = scalar_select 0, %s25, %s23
  $region1: #{forward.1} parent=0
    #allocation2 [shape = 'u8[4096]{0}', space=vmem, size = 0x1000, scoped, tag = 'input window, operand 1, single buffered']
    #allocation3 [shape = 's32[1]{0}', space=sflag, size = 0x4, scoped, tag = 'scoped memory for forward.1']
    #allocation4 [shape = 's32[1]{0}', space=sflag, size = 0x4, scoped, tag = 'scoped memory for forward.1']
    #allocation5 [shape = 'u8[512]{0}', space=vmem, size = 0x400, scoped, tag = 'input window, operand 3, single buffered']
    #allocation6 [shape = 's32[1]{0}', space=sflag, size = 0x4, scoped, tag = 'scoped memory for forward.1']
    #allocation7 [shape = 'u8[512]{0}', space=vmem, size = 0x400, scoped, tag = 'input window, operand 5, single buffered']
    #allocation8 [shape = 'u8[512]{0}', space=vmem, size = 0x400, scoped, tag = 'input window, operand 7, single buffered']
    #allocation9 [shape = 's32[1]{0}', space=sflag, size = 0x4, scoped, tag = 'scoped memory for forward.1']
    #allocation10 [shape = 'u8[4096]{0}', space=vmem, size = 0x1000, scoped, tag = 'input window, operand 8, single buffered']
    #allocation11 [shape = 'u8[512]{0}', space=vmem, size = 0x400, scoped, tag = 'input window, operand 10, single buffered']
    #allocation12 [shape = 's32[1]{0}', space=sflag, size = 0x4, scoped, tag = 'scoped memory for forward.1']
    #allocation13 [shape = 'u8[16384]{0}', space=vmem, size = 0x4000, scoped, tag = 'input window, operand 13, single buffered']
    #allocation14 [shape = 'u8[16384]{0}', space=vmem, size = 0x4000, scoped, tag = 'input window, operand 14, single buffered']
    #allocation15 [shape = 's32[1]{0}', space=sflag, size = 0x4, scoped, tag = 'scoped memory for forward.1']
    #allocation16 [shape = 'u8[8192]{0}', space=vmem, size = 0x2000, scoped, tag = 'input window, operand 15, single buffered']
    #allocation17 [shape = 'u8[512]{0}', space=vmem, size = 0x400, scoped, tag = 'input window, operand 16, single buffered']
    #allocation18 [shape = 's32[1]{0}', space=sflag, size = 0x4, scoped, tag = 'scoped memory for forward.1']
    #allocation19 [shape = 'u8[8192]{0}', space=vmem, size = 0x2000, scoped, tag = 'input window, operand 17, single buffered']
    #allocation20 [shape = 'u8[512]{0}', space=vmem, size = 0x400, scoped, tag = 'input window, operand 18, single buffered']
    #allocation21 [shape = 's32[1]{0}', space=sflag, size = 0x4, scoped, tag = 'scoped memory for forward.1']
    #allocation22 [shape = 'u8[8192]{0}', space=vmem, size = 0x2000, scoped, tag = 'input window, operand 19, single buffered']
    #allocation23 [shape = 'u8[2048]{0}', space=vmem, size = 0x800, scoped, tag = 'output window, operand 0, single buffered']
    %27 = vsyncpa [#allocation3], 0
    %28 = vsyncpa [#allocation6], 0
    %29 = vsyncpa [#allocation9], 0
    %30 = vsyncpa [#allocation12], 0
    %31 = vsyncpa [#allocation15], 0
    %32 = vsyncpa [#allocation18], 0
    %33 = vsyncpa [#allocation21], 0
    %34 = vsyncpa [#allocation4], 0
    // Predicated region
    $region2: #{forward.1} parent=1 // pred_check
      _
    $region3: #{forward.1} parent=1 // pred_check_branch
      %36 = sbr.rel (0) target = $region5
    $region4: #{forward.1} parent=1 // pred_region
      _
    $region5: #{forward.1} parent=1 // pred_fallthru
      _
    // Predicated region
    $region6: #{forward.1} parent=1 // pred_check
      _
    $region7: #{forward.1} parent=1 // pred_check_branch
      %38 = sbr.rel (0) target = $region9
    $region8: #{forward.1} parent=1 // pred_region
      %s40 = ssub.s32 128, 128
      %41 = vsyncadd [#allocation3], %s40
      %s43 = sshll.u32 [#allocation2], 4
      %s44 = int_to_ptr.vmem [resolvable:$true] %s43
      %46 = dma.hbm_to_vmem [thread:$0]  %s1, 128, %s44, [#allocation3]
    $region9: #{forward.1} parent=1 // pred_fallthru
      _
    // Predicated region
    $region10: #{forward.1} parent=1 // pred_check
      _
    $region11: #{forward.1} parent=1 // pred_check_branch
      %48 = sbr.rel (0) target = $region13
    $region12: #{forward.1} parent=1 // pred_region
      _
    $region13: #{forward.1} parent=1 // pred_fallthru
      _
    // Predicated region
    $region14: #{forward.1} parent=1 // pred_check
      _
    $region15: #{forward.1} parent=1 // pred_check_branch
      %50 = sbr.rel (0) target = $region17
    $region16: #{forward.1} parent=1 // pred_region
      %s52 = ssub.s32 16, 16
      %53 = vsyncadd [#allocation6], %s52
      %s55 = sshll.u32 [#allocation5], 4
      %s56 = int_to_ptr.vmem [resolvable:$true] %s55
      %58 = dma.hbm_to_vmem [thread:$0]  %s3, 16, %s56, [#allocation6]
    $region17: #{forward.1} parent=1 // pred_fallthru
      _
    // Predicated region
    $region18: #{forward.1} parent=1 // pred_check
      _
    $region19: #{forward.1} parent=1 // pred_check_branch
      %60 = sbr.rel (0) target = $region21
    $region20: #{forward.1} parent=1 // pred_region
      _
    $region21: #{forward.1} parent=1 // pred_fallthru
      _
    // Predicated region
    $region22: #{forward.1} parent=1 // pred_check
      _
    $region23: #{forward.1} parent=1 // pred_check_branch
      %62 = sbr.rel (0) target = $region25
    $region24: #{forward.1} parent=1 // pred_region
      %s64 = ssub.s32 16, 16
      %65 = vsyncadd [#allocation6], %s64
      %s67 = sshll.u32 [#allocation7], 4
      %s68 = int_to_ptr.vmem [resolvable:$true] %s67
      %70 = dma.hbm_to_vmem [thread:$0]  %s5, 16, %s68, [#allocation6]
    $region25: #{forward.1} parent=1 // pred_fallthru
      _
    // Predicated region
    $region26: #{forward.1} parent=1 // pred_check
      _
    $region27: #{forward.1} parent=1 // pred_check_branch
      %72 = sbr.rel (0) target = $region29
    $region28: #{forward.1} parent=1 // pred_region
      _
    $region29: #{forward.1} parent=1 // pred_fallthru
      _
    // Predicated region
    $region30: #{forward.1} parent=1 // pred_check
      _
    $region31: #{forward.1} parent=1 // pred_check_branch
      %74 = sbr.rel (0) target = $region33
    $region32: #{forward.1} parent=1 // pred_region
      %s76 = ssub.s32 16, 16
      %77 = vsyncadd [#allocation9], %s76
      %s79 = sshll.u32 [#allocation8], 4
      %s80 = int_to_ptr.vmem [resolvable:$true] %s79
      %82 = dma.hbm_to_vmem [thread:$0]  %s7, 16, %s80, [#allocation9]
    $region33: #{forward.1} parent=1 // pred_fallthru
      _
    // Predicated region
    $region34: #{forward.1} parent=1 // pred_check
      _
    $region35: #{forward.1} parent=1 // pred_check_branch
      %84 = sbr.rel (0) target = $region37
    $region36: #{forward.1} parent=1 // pred_region
      %s86 = ssub.s32 128, 128
      %87 = vsyncadd [#allocation9], %s86
      %s89 = sshll.u32 [#allocation10], 4
      %s90 = int_to_ptr.vmem [resolvable:$true] %s89
      %92 = dma.hbm_to_vmem [thread:$0]  %s8, 128, %s90, [#allocation9]
    $region37: #{forward.1} parent=1 // pred_fallthru
      _
    // Predicated region
    $region38: #{forward.1} parent=1 // pred_check
      _
    $region39: #{forward.1} parent=1 // pred_check_branch
      %94 = sbr.rel (0) target = $region41
    $region40: #{forward.1} parent=1 // pred_region
      _
    $region41: #{forward.1} parent=1 // pred_fallthru
      _
    // Predicated region
    $region42: #{forward.1} parent=1 // pred_check
      _
    $region43: #{forward.1} parent=1 // pred_check_branch
      %96 = sbr.rel (0) target = $region45
    $region44: #{forward.1} parent=1 // pred_region
      %s98 = ssub.s32 16, 16
      %99 = vsyncadd [#allocation12], %s98
      %s101 = sshll.u32 [#allocation11], 4
      %s102 = int_to_ptr.vmem [resolvable:$true] %s101
      %104 = dma.hbm_to_vmem [thread:$0]  %s10, 16, %s102, [#allocation12]
    $region45: #{forward.1} parent=1 // pred_fallthru
      _
    // Predicated region
    $region46: #{forward.1} parent=1 // pred_check
      _
    $region47: #{forward.1} parent=1 // pred_check_branch
      %106 = sbr.rel (0) target = $region49
    $region48: #{forward.1} parent=1 // pred_region
      _
    $region49: #{forward.1} parent=1 // pred_fallthru
      _
    // Predicated region
    $region50: #{forward.1} parent=1 // pred_check
      _
    $region51: #{forward.1} parent=1 // pred_check_branch
      %108 = sbr.rel (0) target = $region53
    $region52: #{forward.1} parent=1 // pred_region
      _
    $region53: #{forward.1} parent=1 // pred_fallthru
      _
    // Predicated region
    $region54: #{forward.1} parent=1 // pred_check
      _
    $region55: #{forward.1} parent=1 // pred_check_branch
      %110 = sbr.rel (0) target = $region57
    $region56: #{forward.1} parent=1 // pred_region
      %s112 = ssub.s32 512, 512
      %113 = vsyncadd [#allocation12], %s112
      %s114 = sshll.u32 [#allocation13], 4
      %s115 = int_to_ptr.vmem [resolvable:$true] %s114
      %120 = dma.hbm_to_vmem [thread:$0]  %s13, 512, %s115, [#allocation12], 128, 128, 8
    $region57: #{forward.1} parent=1 // pred_fallthru
      _
    // Predicated region
    $region58: #{forward.1} parent=1 // pred_check
      _
    $region59: #{forward.1} parent=1 // pred_check_branch
      %122 = sbr.rel (0) target = $region61
    $region60: #{forward.1} parent=1 // pred_region
      %s124 = ssub.s32 512, 512
      %125 = vsyncadd [#allocation15], %s124
      %s126 = sshll.u32 [#allocation14], 4
      %s127 = int_to_ptr.vmem [resolvable:$true] %s126
      %132 = dma.hbm_to_vmem [thread:$0]  %s14, 512, %s127, [#allocation15], 128, 128, 8
    $region61: #{forward.1} parent=1 // pred_fallthru
      _
    // Predicated region
    $region62: #{forward.1} parent=1 // pred_check
      _
    $region63: #{forward.1} parent=1 // pred_check_branch
      %134 = sbr.rel (0) target = $region65
    $region64: #{forward.1} parent=1 // pred_region
      %s136 = ssub.s32 256, 256
      %137 = vsyncadd [#allocation15], %s136
      %s138 = sshll.u32 [#allocation16], 4
      %s139 = int_to_ptr.vmem [resolvable:$true] %s138
      %144 = dma.hbm_to_vmem [thread:$0]  %s15, 256, %s139, [#allocation15], 64, 64, 4
    $region65: #{forward.1} parent=1 // pred_fallthru
      _
    // Predicated region
    $region66: #{forward.1} parent=1 // pred_check
      _
    $region67: #{forward.1} parent=1 // pred_check_branch
      %146 = sbr.rel (0) target = $region69
    $region68: #{forward.1} parent=1 // pred_region
      %s148 = ssub.s32 16, 16
      %149 = vsyncadd [#allocation18], %s148
      %s151 = sshll.u32 [#allocation17], 4
      %s152 = int_to_ptr.vmem [resolvable:$true] %s151
      %154 = dma.hbm_to_vmem [thread:$0]  %s16, 16, %s152, [#allocation18]
    $region69: #{forward.1} parent=1 // pred_fallthru
      _
    // Predicated region
    $region70: #{forward.1} parent=1 // pred_check
      _
    $region71: #{forward.1} parent=1 // pred_check_branch
      %156 = sbr.rel (0) target = $region73
    $region72: #{forward.1} parent=1 // pred_region
      %s158 = ssub.s32 256, 256
      %159 = vsyncadd [#allocation18], %s158
      %s160 = sshll.u32 [#allocation19], 4
      %s161 = int_to_ptr.vmem [resolvable:$true] %s160
      %166 = dma.hbm_to_vmem [thread:$0]  %s17, 256, %s161, [#allocation18], 64, 64, 4
    $region73: #{forward.1} parent=1 // pred_fallthru
      _
    // Predicated region
    $region74: #{forward.1} parent=1 // pred_check
      _
    $region75: #{forward.1} parent=1 // pred_check_branch
      %168 = sbr.rel (0) target = $region77
    $region76: #{forward.1} parent=1 // pred_region
      %s170 = ssub.s32 16, 16
      %171 = vsyncadd [#allocation21], %s170
      %s173 = sshll.u32 [#allocation20], 4
      %s174 = int_to_ptr.vmem [resolvable:$true] %s173
      %176 = dma.hbm_to_vmem [thread:$0]  %s18, 16, %s174, [#allocation21]
    $region77: #{forward.1} parent=1 // pred_fallthru
      _
    // Predicated region
    $region78: #{forward.1} parent=1 // pred_check
      _
    $region79: #{forward.1} parent=1 // pred_check_branch
      %178 = sbr.rel (0) target = $region81
    $region80: #{forward.1} parent=1 // pred_region
      %s180 = ssub.s32 256, 256
      %181 = vsyncadd [#allocation21], %s180
      %s182 = sshll.u32 [#allocation22], 4
      %s183 = int_to_ptr.vmem [resolvable:$true] %s182
      %188 = dma.hbm_to_vmem [thread:$0]  %s19, 256, %s183, [#allocation21], 64, 64, 4
    $region81: #{forward.1} parent=1 // pred_fallthru
      _
    // Predicated region
    $region82: #{forward.1} parent=1 // pred_check
      _
    $region83: #{forward.1} parent=1 // pred_check_branch
      %190 = sbr.rel (0) target = $region85
    $region84: #{forward.1} parent=1 // pred_region
      %191 = dma.done [#allocation3], 128
    $region85: #{forward.1} parent=1 // pred_fallthru
      _
    // Predicated region
    $region86: #{forward.1} parent=1 // pred_check
      _
    $region87: #{forward.1} parent=1 // pred_check_branch
      %193 = sbr.rel (0) target = $region89
    $region88: #{forward.1} parent=1 // pred_region
      %194 = dma.done [#allocation6], 16
    $region89: #{forward.1} parent=1 // pred_fallthru
      _
    // Predicated region
    $region90: #{forward.1} parent=1 // pred_check
      _
    $region91: #{forward.1} parent=1 // pred_check_branch
      %196 = sbr.rel (0) target = $region93
    $region92: #{forward.1} parent=1 // pred_region
      %197 = dma.done [#allocation6], 16
    $region93: #{forward.1} parent=1 // pred_fallthru
      _
    // Predicated region
    $region94: #{forward.1} parent=1 // pred_check
      _
    $region95: #{forward.1} parent=1 // pred_check_branch
      %199 = sbr.rel (0) target = $region97
    $region96: #{forward.1} parent=1 // pred_region
      %200 = dma.done [#allocation9], 16
    $region97: #{forward.1} parent=1 // pred_fallthru
      _
    // Predicated region
    $region98: #{forward.1} parent=1 // pred_check
      _
    $region99: #{forward.1} parent=1 // pred_check_branch
      %202 = sbr.rel (0) target = $region101
    $region100: #{forward.1} parent=1 // pred_region
      %203 = dma.done [#allocation9], 128
    $region101: #{forward.1} parent=1 // pred_fallthru
      _
    // Predicated region
    $region102: #{forward.1} parent=1 // pred_check
      _
    $region103: #{forward.1} parent=1 // pred_check_branch
      %205 = sbr.rel (0) target = $region105
    $region104: #{forward.1} parent=1 // pred_region
      %206 = dma.done [#allocation12], 16
    $region105: #{forward.1} parent=1 // pred_fallthru
      _
    // Predicated region
    $region106: #{forward.1} parent=1 // pred_check
      _
    $region107: #{forward.1} parent=1 // pred_check_branch
      %208 = sbr.rel (0) target = $region109
    $region108: #{forward.1} parent=1 // pred_region
      %209 = dma.done [#allocation12], 512
    $region109: #{forward.1} parent=1 // pred_fallthru
      _
    // Predicated region
    $region110: #{forward.1} parent=1 // pred_check
      _
    $region111: #{forward.1} parent=1 // pred_check_branch
      %211 = sbr.rel (0) target = $region113
    $region112: #{forward.1} parent=1 // pred_region
      %212 = dma.done [#allocation15], 512
    $region113: #{forward.1} parent=1 // pred_fallthru
      _
    // Predicated region
    $region114: #{forward.1} parent=1 // pred_check
      _
    $region115: #{forward.1} parent=1 // pred_check_branch
      %214 = sbr.rel (0) target = $region117
    $region116: #{forward.1} parent=1 // pred_region
      %215 = dma.done [#allocation15], 256
    $region117: #{forward.1} parent=1 // pred_fallthru
      _
    // Predicated region
    $region118: #{forward.1} parent=1 // pred_check
      _
    $region119: #{forward.1} parent=1 // pred_check_branch
      %217 = sbr.rel (0) target = $region121
    $region120: #{forward.1} parent=1 // pred_region
      %218 = dma.done [#allocation18], 16
    $region121: #{forward.1} parent=1 // pred_fallthru
      _
    // Predicated region
    $region122: #{forward.1} parent=1 // pred_check
      _
    $region123: #{forward.1} parent=1 // pred_check_branch
      %220 = sbr.rel (0) target = $region125
    $region124: #{forward.1} parent=1 // pred_region
      %221 = dma.done [#allocation18], 256
    $region125: #{forward.1} parent=1 // pred_fallthru
      _
    // Predicated region
    $region126: #{forward.1} parent=1 // pred_check
      _
    $region127: #{forward.1} parent=1 // pred_check_branch
      %223 = sbr.rel (0) target = $region129
    $region128: #{forward.1} parent=1 // pred_region
      %224 = dma.done [#allocation21], 16
    $region129: #{forward.1} parent=1 // pred_fallthru
      _
    // Predicated region
    $region130: #{forward.1} parent=1 // pred_check
      _
    $region131: #{forward.1} parent=1 // pred_check_branch
      %226 = sbr.rel (0) target = $region133
    $region132: #{forward.1} parent=1 // pred_region
      %227 = dma.done [#allocation21], 256
    $region133: #{forward.1} parent=1 // pred_fallthru
      _
    %v229 = vld [vmem:[%s4] sm:$0xf]
    %v230 = vld [vmem:[%s4 + $0x4] sm:$0xf]
    %v231 = vld [vmem:[%s4 + $0x8] sm:$0xf]
    %v232 = vld [vmem:[%s4 + $0xc] sm:$0xf]
    %v233 = vld [vmem:[%s4 + $0x10] sm:$0xf]
    %v234 = vld [vmem:[%s4 + $0x14] sm:$0xf]
    %v235 = vld [vmem:[%s4 + $0x18] sm:$0xf]
    %v236 = vld [vmem:[%s4 + $0x1c] sm:$0xf]
    %v237 = vld [vmem:[#allocation7] sm:$0x1]
    %v238 = vld [vmem:[%s0] sm:$0xff]
    %v239 = vpack.c.bf16 %v238, %v238
    %v241 = vlaneseq
    %v242 = vshrl.u32 %v241, 7
    %v243 = vsub.s32 0, %v242
    %v244 = vrot.slane %v237, %v243
    %v254 = vunpack.c.l.b16 %v229
    %v255 = vunpack.c.l.b16 %v230
    %v256 = vunpack.c.l.b16 %v231
    %v257 = vunpack.c.l.b16 %v232
    %v258 = vunpack.c.l.b16 %v233
    %v259 = vunpack.c.l.b16 %v234
    %v260 = vunpack.c.l.b16 %v235
    %v261 = vunpack.c.l.b16 %v236
    %v262 = vpack.c.b16 %v255, %v254
    %v263 = vpack.c.b16 %v257, %v256
    %v264 = vpack.c.b16 %v259, %v258
    %v265 = vpack.c.b16 %v261, %v260
    %vm270 = vcmask 523264
    %v272 = vsel %vm270, %v239, 0
    %274 = vmatprep.subr.bf16.mxu0 0
    %275 = vmatpush1.bf16.msra.mxu0 0
    %276 = vmatprep.subr.bf16.mxu0 0
    %277 = vmatpush1.bf16.msra.mxu0 0
    %278 = vmatprep.subr.bf16.mxu0 0
    %279 = vmatpush1.bf16.msra.mxu0 0
    %280 = vmatprep.subr.bf16.mxu0 0
    %281 = vmatpush1.bf16.msra.mxu0 0
    %282 = vmatprep.subr.bf16.mxu0 0
    %283 = vmatpush1.bf16.msra.mxu0 %v265
    %284 = vmatprep.subr.bf16.mxu0 0
    %285 = vmatpush1.bf16.msra.mxu0 %v264
    %286 = vmatprep.subr.bf16.mxu0 0
    %287 = vmatpush1.bf16.msra.mxu0 %v263
    %288 = vmatprep.subr.bf16.mxu0 0
    %289 = vmatpush1.bf16.msra.mxu0 %v262
    %290 = vmatprep.subr.bf16.mxu0 0
    %291 = vmatpush2.bf16.msra.mxu0 0
    %292 = vmatprep.subr.bf16.mxu0 0
    %293 = vmatpush2.bf16.msra.mxu0 0
    %294 = vmatprep.subr.bf16.mxu0 0
    %295 = vmatpush2.bf16.msra.mxu0 0
    %296 = vmatprep.subr.bf16.mxu0 0
    %297 = vmatpush2.bf16.msra.mxu0 0
    %298 = vmatprep.subr.bf16.mxu0 0
    %299 = vmatpush2.bf16.msra.mxu0 0
    %300 = vmatprep.subr.bf16.mxu0 0
    %301 = vmatpush2.bf16.msra.mxu0 0
    %302 = vmatprep.subr.bf16.mxu0 0
    %303 = vmatpush2.bf16.msra.mxu0 0
    %304 = vmatprep.subr.bf16.mxu0 0
    %305 = vmatpush2.bf16.msra.mxu0 0
    %306 = vmatprep.mubr.bf16.mxu0 0
    %307 = vmatmul.mubr.bf16.gmra.mxu0 %v272
    %v308 = vpop.f32.mrf.mxu0
    %v309 = vadd.f32 %v244, %v308
    %v310 = vpop.f32.mrf.mxu0
    %v311 = vpop.f32.mrf.mxu0
    %v312 = vpop.f32.mrf.mxu0
    %313 = vdwg.mxu0
    %v314 = vld [vmem:[#allocation2] sm:$0xff]
    %v315 = vpack.c.bf16 %v314, %v314
    %v317 = vsel %vm270, %v315, 0
    %319 = vmatprep.subr.bf16.mxu0 0
    %320 = vmatpush1.bf16.msra.mxu0 0
    %321 = vmatprep.subr.bf16.mxu0 0
    %322 = vmatpush1.bf16.msra.mxu0 0
    %323 = vmatprep.subr.bf16.mxu0 0
    %324 = vmatpush1.bf16.msra.mxu0 0
    %325 = vmatprep.subr.bf16.mxu0 0
    %326 = vmatpush1.bf16.msra.mxu0 0
    %327 = vmatprep.subr.bf16.mxu0 0
    %328 = vmatpush1.bf16.msra.mxu0 %v265
    %329 = vmatprep.subr.bf16.mxu0 0
    %330 = vmatpush1.bf16.msra.mxu0 %v264
    %331 = vmatprep.subr.bf16.mxu0 0
    %332 = vmatpush1.bf16.msra.mxu0 %v263
    %333 = vmatprep.subr.bf16.mxu0 0
    %334 = vmatpush1.bf16.msra.mxu0 %v262
    %335 = vmatprep.subr.bf16.mxu0 0
    %336 = vmatpush2.bf16.msra.mxu0 0
    %337 = vmatprep.subr.bf16.mxu0 0
    %338 = vmatpush2.bf16.msra.mxu0 0
    %339 = vmatprep.subr.bf16.mxu0 0
    %340 = vmatpush2.bf16.msra.mxu0 0
    %341 = vmatprep.subr.bf16.mxu0 0
    %342 = vmatpush2.bf16.msra.mxu0 0
    %343 = vmatprep.subr.bf16.mxu0 0
    %344 = vmatpush2.bf16.msra.mxu0 0
    %345 = vmatprep.subr.bf16.mxu0 0
    %346 = vmatpush2.bf16.msra.mxu0 0
    %347 = vmatprep.subr.bf16.mxu0 0
    %348 = vmatpush2.bf16.msra.mxu0 0
    %349 = vmatprep.subr.bf16.mxu0 0
    %350 = vmatpush2.bf16.msra.mxu0 0
    %351 = vmatprep.mubr.bf16.mxu0 0
    %352 = vmatmul.mubr.bf16.gmra.mxu0 %v317
    %v353 = vpop.f32.mrf.mxu0
    %v354 = vadd.f32 %v244, %v353
    %v355 = vpop.f32.mrf.mxu0
    %v356 = vpop.f32.mrf.mxu0
    %v357 = vpop.f32.mrf.mxu0
    %358 = vdwg.mxu0
    %v360 = vcombine.high %v309, %v309
    %vm362 = vcmask 257024
    %v363 = vsel %vm362, %v309, 0.0
    %v364 = vrot.slane %v363, 4
    %v365 = vadd.f32 %v363, %v364
    %v366 = vrot.slane %v365, 2
    %v367 = vadd.f32 %v365, %v366
    %v368 = vrot.slane %v367, 1
    %v369 = vadd.f32 %v367, %v368
    %v370 = vsel %vm362, %v360, 0.0
    %v371 = vrot.slane %v370, 4
    %v372 = vadd.f32 %v370, %v371
    %v373 = vrot.slane %v372, 2
    %v374 = vadd.f32 %v372, %v373
    %v375 = vrot.slane %v374, 1
    %v376 = vadd.f32 %v374, %v375
    %v377 = vrcp.pop 4.0
    %v378 = vmul.f32 %v369, %v377
    %v379 = vmul.f32 %v376, %v377
    %v381 = vcombine.high %v354, %v354
    %v383 = vsel %vm362, %v354, 0.0
    %v384 = vrot.slane %v383, 4
    %v385 = vadd.f32 %v383, %v384
    %v386 = vrot.slane %v385, 2
    %v387 = vadd.f32 %v385, %v386
    %v388 = vrot.slane %v387, 1
    %v389 = vadd.f32 %v387, %v388
    %v390 = vsel %vm362, %v381, 0.0
    %v391 = vrot.slane %v390, 4
    %v392 = vadd.f32 %v390, %v391
    %v393 = vrot.slane %v392, 2
    %v394 = vadd.f32 %v392, %v393
    %v395 = vrot.slane %v394, 1
    %v396 = vadd.f32 %v394, %v395
    %v397 = vmul.f32 %v389, %v377
    %v398 = vmul.f32 %v396, %v377
    %v399 = vld [vmem:[%s6] sm:$0xff]
    %v400 = vld [vmem:[%s6 + $0x8] sm:$0xff]
    %v401 = vld [vmem:[%s6 + $0x10] sm:$0xff]
    %v402 = vld [vmem:[%s6 + $0x18] sm:$0xff]
    %v403 = vld [vmem:[#allocation8] sm:$0x1]
    %v405 = vlaneseq
    %v406 = vshrl.u32 %v405, 7
    %v407 = vsub.s32 0, %v406
    %v408 = vrot.slane %v403, %v407
    %vm412 = vcmask 1041409
    %v413 = vsel %vm412, %v379, %v378
    %vm414 = vcmask 261120
    %v415 = vsel %vm414, %v413, 0
    %417 = vmatprep.subr.mxu0 0.0
    %418 = vmatpush1.msra.mxu0 0.0
    %419 = vmatprep.subr.mxu0 0.0
    %420 = vmatpush1.msra.mxu0 0.0
    %421 = vmatprep.subr.mxu0 0.0
    %422 = vmatpush1.msra.mxu0 0.0
    %423 = vmatprep.subr.mxu0 0.0
    %424 = vmatpush1.msra.mxu0 0.0
    %425 = vmatprep.subr.mxu0 0.0
    %426 = vmatpush1.msra.mxu0 0.0
    %427 = vmatprep.subr.mxu0 0.0
    %428 = vmatpush1.msra.mxu0 0.0
    %429 = vmatprep.subr.mxu0 0.0
    %430 = vmatpush1.msra.mxu0 0.0
    %431 = vmatprep.subr.mxu0 0.0
    %432 = vmatpush1.msra.mxu0 0.0
    %433 = vmatprep.subr.mxu0 0.0
    %434 = vmatpush1.msra.mxu0 0.0
    %435 = vmatprep.subr.mxu0 0.0
    %436 = vmatpush1.msra.mxu0 0.0
    %437 = vmatprep.subr.mxu0 0.0
    %438 = vmatpush1.msra.mxu0 0.0
    %439 = vmatprep.subr.mxu0 0.0
    %440 = vmatpush1.msra.mxu0 0.0
    %441 = vmatprep.subr.mxu0 0.0
    %442 = vmatpush1.msra.mxu0 %v402
    %443 = vmatprep.subr.mxu0 0.0
    %444 = vmatpush1.msra.mxu0 %v401
    %445 = vmatprep.subr.mxu0 0.0
    %446 = vmatpush1.msra.mxu0 %v400
    %447 = vmatprep.subr.mxu0 0.0
    %448 = vmatpush1.msra.mxu0 %v399
    %449 = vmatprep.subr.mxu0 0.0
    %450 = vmatpush2.msra.mxu0 0.0
    %451 = vmatprep.subr.mxu0 0.0
    %452 = vmatpush2.msra.mxu0 0.0
    %453 = vmatprep.subr.mxu0 0.0
    %454 = vmatpush2.msra.mxu0 0.0
    %455 = vmatprep.subr.mxu0 0.0
    %456 = vmatpush2.msra.mxu0 0.0
    %457 = vmatprep.subr.mxu0 0.0
    %458 = vmatpush2.msra.mxu0 0.0
    %459 = vmatprep.subr.mxu0 0.0
    %460 = vmatpush2.msra.mxu0 0.0
    %461 = vmatprep.subr.mxu0 0.0
    %462 = vmatpush2.msra.mxu0 0.0
    %463 = vmatprep.subr.mxu0 0.0
    %464 = vmatpush2.msra.mxu0 0.0
    %465 = vmatprep.subr.mxu0 0.0
    %466 = vmatpush2.msra.mxu0 0.0
    %467 = vmatprep.subr.mxu0 0.0
    %468 = vmatpush2.msra.mxu0 0.0
    %469 = vmatprep.subr.mxu0 0.0
    %470 = vmatpush2.msra.mxu0 0.0
    %471 = vmatprep.subr.mxu0 0.0
    %472 = vmatpush2.msra.mxu0 0.0
    %473 = vmatprep.subr.mxu0 0.0
    %474 = vmatpush2.msra.mxu0 0.0
    %475 = vmatprep.subr.mxu0 0.0
    %476 = vmatpush2.msra.mxu0 0.0
    %477 = vmatprep.subr.mxu0 0.0
    %478 = vmatpush2.msra.mxu0 0.0
    %479 = vmatprep.subr.mxu0 0.0
    %480 = vmatpush2.msra.mxu0 0.0
    %481 = vmatprep.mubr.f32.mxu0 0.0
    %482 = vmatmul.mubr.f32.gmra.mxu0 %v415
    %v483 = vpop.f32.mrf.mxu0
    %v484 = vadd.f32 %v408, %v483
    %v485 = vpop.f32.mrf.mxu0
    %486 = vdwg.mxu0
    %v487 = vld [vmem:[#allocation10] sm:$0xff]
    %v488 = vld [vmem:[%s9] sm:$0xff]
    %v489 = vld [vmem:[%s9 + $0x8] sm:$0xff]
    %v490 = vld [vmem:[%s9 + $0x10] sm:$0xff]
    %v491 = vld [vmem:[%s9 + $0x18] sm:$0xff]
    %v492 = vld [vmem:[#allocation11] sm:$0x1]
    %v494 = vlaneseq
    %v495 = vshrl.u32 %v494, 7
    %v496 = vsub.s32 0, %v495
    %v497 = vrot.slane %v492, %v496
    %v500 = vsel %vm414, %v487, 0
    %502 = vmatprep.subr.mxu0 0.0
    %503 = vmatpush1.msra.mxu0 0.0
    %504 = vmatprep.subr.mxu0 0.0
    %505 = vmatpush1.msra.mxu0 0.0
    %506 = vmatprep.subr.mxu0 0.0
    %507 = vmatpush1.msra.mxu0 0.0
    %508 = vmatprep.subr.mxu0 0.0
    %509 = vmatpush1.msra.mxu0 0.0
    %510 = vmatprep.subr.mxu0 0.0
    %511 = vmatpush1.msra.mxu0 0.0
    %512 = vmatprep.subr.mxu0 0.0
    %513 = vmatpush1.msra.mxu0 0.0
    %514 = vmatprep.subr.mxu0 0.0
    %515 = vmatpush1.msra.mxu0 0.0
    %516 = vmatprep.subr.mxu0 0.0
    %517 = vmatpush1.msra.mxu0 0.0
    %518 = vmatprep.subr.mxu0 0.0
    %519 = vmatpush1.msra.mxu0 0.0
    %520 = vmatprep.subr.mxu0 0.0
    %521 = vmatpush1.msra.mxu0 0.0
    %522 = vmatprep.subr.mxu0 0.0
    %523 = vmatpush1.msra.mxu0 0.0
    %524 = vmatprep.subr.mxu0 0.0
    %525 = vmatpush1.msra.mxu0 0.0
    %526 = vmatprep.subr.mxu0 0.0
    %527 = vmatpush1.msra.mxu0 %v491
    %528 = vmatprep.subr.mxu0 0.0
    %529 = vmatpush1.msra.mxu0 %v490
    %530 = vmatprep.subr.mxu0 0.0
    %531 = vmatpush1.msra.mxu0 %v489
    %532 = vmatprep.subr.mxu0 0.0
    %533 = vmatpush1.msra.mxu0 %v488
    %534 = vmatprep.subr.mxu0 0.0
    %535 = vmatpush2.msra.mxu0 0.0
    %536 = vmatprep.subr.mxu0 0.0
    %537 = vmatpush2.msra.mxu0 0.0
    %538 = vmatprep.subr.mxu0 0.0
    %539 = vmatpush2.msra.mxu0 0.0
    %540 = vmatprep.subr.mxu0 0.0
    %541 = vmatpush2.msra.mxu0 0.0
    %542 = vmatprep.subr.mxu0 0.0
    %543 = vmatpush2.msra.mxu0 0.0
    %544 = vmatprep.subr.mxu0 0.0
    %545 = vmatpush2.msra.mxu0 0.0
    %546 = vmatprep.subr.mxu0 0.0
    %547 = vmatpush2.msra.mxu0 0.0
    %548 = vmatprep.subr.mxu0 0.0
    %549 = vmatpush2.msra.mxu0 0.0
    %550 = vmatprep.subr.mxu0 0.0
    %551 = vmatpush2.msra.mxu0 0.0
    %552 = vmatprep.subr.mxu0 0.0
    %553 = vmatpush2.msra.mxu0 0.0
    %554 = vmatprep.subr.mxu0 0.0
    %555 = vmatpush2.msra.mxu0 0.0
    %556 = vmatprep.subr.mxu0 0.0
    %557 = vmatpush2.msra.mxu0 0.0
    %558 = vmatprep.subr.mxu0 0.0
    %559 = vmatpush2.msra.mxu0 0.0
    %560 = vmatprep.subr.mxu0 0.0
    %561 = vmatpush2.msra.mxu0 0.0
    %562 = vmatprep.subr.mxu0 0.0
    %563 = vmatpush2.msra.mxu0 0.0
    %564 = vmatprep.subr.mxu0 0.0
    %565 = vmatpush2.msra.mxu0 0.0
    %566 = vmatprep.mubr.f32.mxu0 0.0
    %567 = vmatmul.mubr.f32.gmra.mxu0 %v500
    %v568 = vpop.f32.mrf.mxu0
    %v569 = vadd.f32 %v497, %v568
    %v570 = vpop.f32.mrf.mxu0
    %571 = vdwg.mxu0
    %v572 = vmax.f32 %v569, 0.0
    %v573 = vmul.f32 %v572, %v572
    %v574 = vsel %vm414, %v573, 0.0
    %575 = vadd.xlane.f32.xlu0 %v574
    %v576 = vpop.xlane.xlu0 %575
    %v577 = vmax.f32 %v576, 1e-24
    %v578 = vrsqrt.pop %v577
    %v579 = vmul.f32 %v572, %v578
    %v580 = vmul.f32 %v378, %v378
    %v581 = vmul.f32 %v379, %v379
    %v584 = vsel %vm412, %v581, %v580
    %vm586 = vcmask 254976
    %v587 = vsel %vm586, %v584, 0.0
    %588 = vadd.xlane.f32.xlu0 %v587
    %v589 = vpop.xlane.xlu0 %588
    %v590 = vmax.f32 %v589, 1e-24
    %v591 = vrsqrt.pop %v590
    %v593 = vrot.slane %v591, 1
    %v596 = vmul.f32 %v378, %v591
    %v597 = vmul.f32 %v379, %v593
    %v600 = vrot.slane %v597, 7
    %v601 = vsel %vm412, %v600, %v596
    %v602 = vsel %vm414, %v601, 0
    %v605 = vsel %vm414, %v579, 0
    %607 = vmatprep.subr.mxu0 0.0
    %608 = vmatpush1.xpose.msra.mxu0 0.0
    %609 = vmatprep.subr.mxu0 0.0
    %610 = vmatpush1.xpose.msra.mxu0 0.0
    %611 = vmatprep.subr.mxu0 0.0
    %612 = vmatpush1.xpose.msra.mxu0 0.0
    %613 = vmatprep.subr.mxu0 0.0
    %614 = vmatpush1.xpose.msra.mxu0 0.0
    %615 = vmatprep.subr.mxu0 0.0
    %616 = vmatpush1.xpose.msra.mxu0 0.0
    %617 = vmatprep.subr.mxu0 0.0
    %618 = vmatpush1.xpose.msra.mxu0 0.0
    %619 = vmatprep.subr.mxu0 0.0
    %620 = vmatpush1.xpose.msra.mxu0 0.0
    %621 = vmatprep.subr.mxu0 0.0
    %622 = vmatpush1.xpose.msra.mxu0 0.0
    %623 = vmatprep.subr.mxu0 0.0
    %624 = vmatpush1.xpose.msra.mxu0 0.0
    %625 = vmatprep.subr.mxu0 0.0
    %626 = vmatpush1.xpose.msra.mxu0 0.0
    %627 = vmatprep.subr.mxu0 0.0
    %628 = vmatpush1.xpose.msra.mxu0 0.0
    %629 = vmatprep.subr.mxu0 0.0
    %630 = vmatpush1.xpose.msra.mxu0 0.0
    %631 = vmatprep.subr.mxu0 0.0
    %632 = vmatpush1.xpose.msra.mxu0 0.0
    %633 = vmatprep.subr.mxu0 0.0
    %634 = vmatpush1.xpose.msra.mxu0 0.0
    %635 = vmatprep.subr.mxu0 0.0
    %636 = vmatpush1.xpose.msra.mxu0 0.0
    %637 = vmatprep.subr.mxu0 0.0
    %638 = vmatpush1.xpose.msra.mxu0 %v605
    %639 = vmatprep.subr.mxu0 0.0
    %640 = vmatpush2.xpose.msra.mxu0 0.0
    %641 = vmatprep.subr.mxu0 0.0
    %642 = vmatpush2.xpose.msra.mxu0 0.0
    %643 = vmatprep.subr.mxu0 0.0
    %644 = vmatpush2.xpose.msra.mxu0 0.0
    %645 = vmatprep.subr.mxu0 0.0
    %646 = vmatpush2.xpose.msra.mxu0 0.0
    %647 = vmatprep.subr.mxu0 0.0
    %648 = vmatpush2.xpose.msra.mxu0 0.0
    %649 = vmatprep.subr.mxu0 0.0
    %650 = vmatpush2.xpose.msra.mxu0 0.0
    %651 = vmatprep.subr.mxu0 0.0
    %652 = vmatpush2.xpose.msra.mxu0 0.0
    %653 = vmatprep.subr.mxu0 0.0
    %654 = vmatpush2.xpose.msra.mxu0 0.0
    %655 = vmatprep.subr.mxu0 0.0
    %656 = vmatpush2.xpose.msra.mxu0 0.0
    %657 = vmatprep.subr.mxu0 0.0
    %658 = vmatpush2.xpose.msra.mxu0 0.0
    %659 = vmatprep.subr.mxu0 0.0
    %660 = vmatpush2.xpose.msra.mxu0 0.0
    %661 = vmatprep.subr.mxu0 0.0
    %662 = vmatpush2.xpose.msra.mxu0 0.0
    %663 = vmatprep.subr.mxu0 0.0
    %664 = vmatpush2.xpose.msra.mxu0 0.0
    %665 = vmatprep.subr.mxu0 0.0
    %666 = vmatpush2.xpose.msra.mxu0 0.0
    %667 = vmatprep.subr.mxu0 0.0
    %668 = vmatpush2.xpose.msra.mxu0 0.0
    %669 = vmatprep.subr.mxu0 0.0
    %670 = vmatpush2.xpose.msra.mxu0 0.0
    %671 = vmatprep.mubr.f32.mxu0 0.0
    %672 = vmatmul.mubr.f32.gmra.mxu0 %v602
    %v673 = vpop.f32.mrf.mxu0
    %v674 = vadd.f32 0.0, %v673
    %v675 = vpop.f32.mrf.mxu0
    %676 = vdwg.mxu0
    %v677 = vmul.f32 %v674, 14.285714
    %v678 = vld [vmem:[%s11] sm:$0xff]
    %v679 = vld [vmem:[%s11 + $0x8] sm:$0xff]
    %v680 = vld [vmem:[%s11 + $0x10] sm:$0xff]
    %v681 = vld [vmem:[%s11 + $0x18] sm:$0xff]
    %v683 = vsel %vm414, %v572, 0
    %685 = vmatprep.subr.mxu0 0.0
    %686 = vmatpush1.msra.mxu0 0.0
    %687 = vmatprep.subr.mxu0 0.0
    %688 = vmatpush1.msra.mxu0 0.0
    %689 = vmatprep.subr.mxu0 0.0
    %690 = vmatpush1.msra.mxu0 0.0
    %691 = vmatprep.subr.mxu0 0.0
    %692 = vmatpush1.msra.mxu0 0.0
    %693 = vmatprep.subr.mxu0 0.0
    %694 = vmatpush1.msra.mxu0 0.0
    %695 = vmatprep.subr.mxu0 0.0
    %696 = vmatpush1.msra.mxu0 0.0
    %697 = vmatprep.subr.mxu0 0.0
    %698 = vmatpush1.msra.mxu0 0.0
    %699 = vmatprep.subr.mxu0 0.0
    %700 = vmatpush1.msra.mxu0 0.0
    %701 = vmatprep.subr.mxu0 0.0
    %702 = vmatpush1.msra.mxu0 0.0
    %703 = vmatprep.subr.mxu0 0.0
    %704 = vmatpush1.msra.mxu0 0.0
    %705 = vmatprep.subr.mxu0 0.0
    %706 = vmatpush1.msra.mxu0 0.0
    %707 = vmatprep.subr.mxu0 0.0
    %708 = vmatpush1.msra.mxu0 0.0
    %709 = vmatprep.subr.mxu0 0.0
    %710 = vmatpush1.msra.mxu0 %v681
    %711 = vmatprep.subr.mxu0 0.0
    %712 = vmatpush1.msra.mxu0 %v680
    %713 = vmatprep.subr.mxu0 0.0
    %714 = vmatpush1.msra.mxu0 %v679
    %715 = vmatprep.subr.mxu0 0.0
    %716 = vmatpush1.msra.mxu0 %v678
    %717 = vmatprep.subr.mxu0 0.0
    %718 = vmatpush2.msra.mxu0 0.0
    %719 = vmatprep.subr.mxu0 0.0
    %720 = vmatpush2.msra.mxu0 0.0
    %721 = vmatprep.subr.mxu0 0.0
    %722 = vmatpush2.msra.mxu0 0.0
    %723 = vmatprep.subr.mxu0 0.0
    %724 = vmatpush2.msra.mxu0 0.0
    %725 = vmatprep.subr.mxu0 0.0
    %726 = vmatpush2.msra.mxu0 0.0
    %727 = vmatprep.subr.mxu0 0.0
    %728 = vmatpush2.msra.mxu0 0.0
    %729 = vmatprep.subr.mxu0 0.0
    %730 = vmatpush2.msra.mxu0 0.0
    %731 = vmatprep.subr.mxu0 0.0
    %732 = vmatpush2.msra.mxu0 0.0
    %733 = vmatprep.subr.mxu0 0.0
    %734 = vmatpush2.msra.mxu0 0.0
    %735 = vmatprep.subr.mxu0 0.0
    %736 = vmatpush2.msra.mxu0 0.0
    %737 = vmatprep.subr.mxu0 0.0
    %738 = vmatpush2.msra.mxu0 0.0
    %739 = vmatprep.subr.mxu0 0.0
    %740 = vmatpush2.msra.mxu0 0.0
    %741 = vmatprep.subr.mxu0 0.0
    %742 = vmatpush2.msra.mxu0 0.0
    %743 = vmatprep.subr.mxu0 0.0
    %744 = vmatpush2.msra.mxu0 0.0
    %745 = vmatprep.subr.mxu0 0.0
    %746 = vmatpush2.msra.mxu0 0.0
    %747 = vmatprep.subr.mxu0 0.0
    %748 = vmatpush2.msra.mxu0 0.0
    %749 = vmatprep.mubr.f32.mxu0 0.0
    %750 = vmatmul.mubr.f32.gmra.mxu0 %v683
    %v751 = vpop.f32.mrf.mxu0
    %v752 = vadd.f32 0.0, %v751
    %v753 = vpop.f32.mrf.mxu0
    %754 = vdwg.mxu0
    %v755 = vld [vmem:[%s12] sm:$0xff]
    %v756 = vld [vmem:[%s12 + $0x8] sm:$0xff]
    %v757 = vld [vmem:[%s12 + $0x10] sm:$0xff]
    %v758 = vld [vmem:[%s12 + $0x18] sm:$0xff]
    %v759 = vsel %vm414, %v309, 0
    %761 = vmatprep.subr.mxu0 0.0
    %762 = vmatpush1.msra.mxu0 0.0
    %763 = vmatprep.subr.mxu0 0.0
    %764 = vmatpush1.msra.mxu0 0.0
    %765 = vmatprep.subr.mxu0 0.0
    %766 = vmatpush1.msra.mxu0 0.0
    %767 = vmatprep.subr.mxu0 0.0
    %768 = vmatpush1.msra.mxu0 0.0
    %769 = vmatprep.subr.mxu0 0.0
    %770 = vmatpush1.msra.mxu0 0.0
    %771 = vmatprep.subr.mxu0 0.0
    %772 = vmatpush1.msra.mxu0 0.0
    %773 = vmatprep.subr.mxu0 0.0
    %774 = vmatpush1.msra.mxu0 0.0
    %775 = vmatprep.subr.mxu0 0.0
    %776 = vmatpush1.msra.mxu0 0.0
    %777 = vmatprep.subr.mxu0 0.0
    %778 = vmatpush1.msra.mxu0 0.0
    %779 = vmatprep.subr.mxu0 0.0
    %780 = vmatpush1.msra.mxu0 0.0
    %781 = vmatprep.subr.mxu0 0.0
    %782 = vmatpush1.msra.mxu0 0.0
    %783 = vmatprep.subr.mxu0 0.0
    %784 = vmatpush1.msra.mxu0 0.0
    %785 = vmatprep.subr.mxu0 0.0
    %786 = vmatpush1.msra.mxu0 %v758
    %787 = vmatprep.subr.mxu0 0.0
    %788 = vmatpush1.msra.mxu0 %v757
    %789 = vmatprep.subr.mxu0 0.0
    %790 = vmatpush1.msra.mxu0 %v756
    %791 = vmatprep.subr.mxu0 0.0
    %792 = vmatpush1.msra.mxu0 %v755
    %793 = vmatprep.subr.mxu0 0.0
    %794 = vmatpush2.msra.mxu0 0.0
    %795 = vmatprep.subr.mxu0 0.0
    %796 = vmatpush2.msra.mxu0 0.0
    %797 = vmatprep.subr.mxu0 0.0
    %798 = vmatpush2.msra.mxu0 0.0
    %799 = vmatprep.subr.mxu0 0.0
    %800 = vmatpush2.msra.mxu0 0.0
    %801 = vmatprep.subr.mxu0 0.0
    %802 = vmatpush2.msra.mxu0 0.0
    %803 = vmatprep.subr.mxu0 0.0
    %804 = vmatpush2.msra.mxu0 0.0
    %805 = vmatprep.subr.mxu0 0.0
    %806 = vmatpush2.msra.mxu0 0.0
    %807 = vmatprep.subr.mxu0 0.0
    %808 = vmatpush2.msra.mxu0 0.0
    %809 = vmatprep.subr.mxu0 0.0
    %810 = vmatpush2.msra.mxu0 0.0
    %811 = vmatprep.subr.mxu0 0.0
    %812 = vmatpush2.msra.mxu0 0.0
    %813 = vmatprep.subr.mxu0 0.0
    %814 = vmatpush2.msra.mxu0 0.0
    %815 = vmatprep.subr.mxu0 0.0
    %816 = vmatpush2.msra.mxu0 0.0
    %817 = vmatprep.subr.mxu0 0.0
    %818 = vmatpush2.msra.mxu0 0.0
    %819 = vmatprep.subr.mxu0 0.0
    %820 = vmatpush2.msra.mxu0 0.0
    %821 = vmatprep.subr.mxu0 0.0
    %822 = vmatpush2.msra.mxu0 0.0
    %823 = vmatprep.subr.mxu0 0.0
    %824 = vmatpush2.msra.mxu0 0.0
    %825 = vmatprep.mubr.f32.mxu0 0.0
    %826 = vmatmul.mubr.f32.gmra.mxu0 %v759
    %v827 = vpop.f32.mrf.mxu0
    %v828 = vadd.f32 0.0, %v827
    %v829 = vpop.f32.mrf.mxu0
    %830 = vdwg.mxu0
    %v832 = vcombine.high %v828, %v828
    %v833 = vld [vmem:[#allocation13] sm:$0xff]
    %v834 = vld [vmem:[#allocation13 + $0x8] sm:$0xff]
    %v835 = vld [vmem:[#allocation13 + $0x10] sm:$0xff]
    %v836 = vld [vmem:[#allocation13 + $0x18] sm:$0xff]
    %837 = vmatprep.subr.mxu0 0.0
    %838 = vmatpush1.msra.mxu0 0.0
    %839 = vmatprep.subr.mxu0 0.0
    %840 = vmatpush1.msra.mxu0 0.0
    %841 = vmatprep.subr.mxu0 0.0
    %842 = vmatpush1.msra.mxu0 0.0
    %843 = vmatprep.subr.mxu0 0.0
    %844 = vmatpush1.msra.mxu0 0.0
    %845 = vmatprep.subr.mxu0 0.0
    %846 = vmatpush1.msra.mxu0 0.0
    %847 = vmatprep.subr.mxu0 0.0
    %848 = vmatpush1.msra.mxu0 0.0
    %849 = vmatprep.subr.mxu0 0.0
    %850 = vmatpush1.msra.mxu0 0.0
    %851 = vmatprep.subr.mxu0 0.0
    %852 = vmatpush1.msra.mxu0 0.0
    %853 = vmatprep.subr.mxu0 0.0
    %854 = vmatpush1.msra.mxu0 0.0
    %855 = vmatprep.subr.mxu0 0.0
    %856 = vmatpush1.msra.mxu0 0.0
    %857 = vmatprep.subr.mxu0 0.0
    %858 = vmatpush1.msra.mxu0 0.0
    %859 = vmatprep.subr.mxu0 0.0
    %860 = vmatpush1.msra.mxu0 0.0
    %861 = vmatprep.subr.mxu0 0.0
    %862 = vmatpush1.msra.mxu0 %v836
    %863 = vmatprep.subr.mxu0 0.0
    %864 = vmatpush1.msra.mxu0 %v835
    %865 = vmatprep.subr.mxu0 0.0
    %866 = vmatpush1.msra.mxu0 %v834
    %867 = vmatprep.subr.mxu0 0.0
    %868 = vmatpush1.msra.mxu0 %v833
    %869 = vmatprep.subr.mxu0 0.0
    %870 = vmatpush2.msra.mxu0 0.0
    %871 = vmatprep.subr.mxu0 0.0
    %872 = vmatpush2.msra.mxu0 0.0
    %873 = vmatprep.subr.mxu0 0.0
    %874 = vmatpush2.msra.mxu0 0.0
    %875 = vmatprep.subr.mxu0 0.0
    %876 = vmatpush2.msra.mxu0 0.0
    %877 = vmatprep.subr.mxu0 0.0
    %878 = vmatpush2.msra.mxu0 0.0
    %879 = vmatprep.subr.mxu0 0.0
    %880 = vmatpush2.msra.mxu0 0.0
    %881 = vmatprep.subr.mxu0 0.0
    %882 = vmatpush2.msra.mxu0 0.0
    %883 = vmatprep.subr.mxu0 0.0
    %884 = vmatpush2.msra.mxu0 0.0
    %885 = vmatprep.subr.mxu0 0.0
    %886 = vmatpush2.msra.mxu0 0.0
    %887 = vmatprep.subr.mxu0 0.0
    %888 = vmatpush2.msra.mxu0 0.0
    %889 = vmatprep.subr.mxu0 0.0
    %890 = vmatpush2.msra.mxu0 0.0
    %891 = vmatprep.subr.mxu0 0.0
    %892 = vmatpush2.msra.mxu0 0.0
    %893 = vmatprep.subr.mxu0 0.0
    %894 = vmatpush2.msra.mxu0 0.0
    %895 = vmatprep.subr.mxu0 0.0
    %896 = vmatpush2.msra.mxu0 0.0
    %897 = vmatprep.subr.mxu0 0.0
    %898 = vmatpush2.msra.mxu0 0.0
    %899 = vmatprep.subr.mxu0 0.0
    %900 = vmatpush2.msra.mxu0 0.0
    %901 = vmatprep.mubr.f32.mxu0 0.0
    %902 = vmatmul.mubr.f32.gmra.mxu0 %v759
    %v903 = vpop.f32.mrf.mxu0
    %v904 = vadd.f32 0.0, %v903
    %v905 = vpop.f32.mrf.mxu0
    %906 = vdwg.mxu0
    %v908 = vcombine.high %v904, %v904
    %v910 = vsel %vm414, %v752, 0
    %v912 = vsel %vm414, %v828, 0
    %914 = vmatprep.subr.mxu0 0.0
    %915 = vmatpush1.xpose.msra.mxu0 0.0
    %916 = vmatprep.subr.mxu0 0.0
    %917 = vmatpush1.xpose.msra.mxu0 0.0
    %918 = vmatprep.subr.mxu0 0.0
    %919 = vmatpush1.xpose.msra.mxu0 0.0
    %920 = vmatprep.subr.mxu0 0.0
    %921 = vmatpush1.xpose.msra.mxu0 0.0
    %922 = vmatprep.subr.mxu0 0.0
    %923 = vmatpush1.xpose.msra.mxu0 0.0
    %924 = vmatprep.subr.mxu0 0.0
    %925 = vmatpush1.xpose.msra.mxu0 0.0
    %926 = vmatprep.subr.mxu0 0.0
    %927 = vmatpush1.xpose.msra.mxu0 0.0
    %928 = vmatprep.subr.mxu0 0.0
    %929 = vmatpush1.xpose.msra.mxu0 0.0
    %930 = vmatprep.subr.mxu0 0.0
    %931 = vmatpush1.xpose.msra.mxu0 0.0
    %932 = vmatprep.subr.mxu0 0.0
    %933 = vmatpush1.xpose.msra.mxu0 0.0
    %934 = vmatprep.subr.mxu0 0.0
    %935 = vmatpush1.xpose.msra.mxu0 0.0
    %936 = vmatprep.subr.mxu0 0.0
    %937 = vmatpush1.xpose.msra.mxu0 0.0
    %938 = vmatprep.subr.mxu0 0.0
    %939 = vmatpush1.xpose.msra.mxu0 0.0
    %940 = vmatprep.subr.mxu0 0.0
    %941 = vmatpush1.xpose.msra.mxu0 0.0
    %942 = vmatprep.subr.mxu0 0.0
    %943 = vmatpush1.xpose.msra.mxu0 0.0
    %944 = vmatprep.subr.mxu0 0.0
    %945 = vmatpush1.xpose.msra.mxu0 %v912
    %946 = vmatprep.subr.mxu0 0.0
    %947 = vmatpush2.xpose.msra.mxu0 0.0
    %948 = vmatprep.subr.mxu0 0.0
    %949 = vmatpush2.xpose.msra.mxu0 0.0
    %950 = vmatprep.subr.mxu0 0.0
    %951 = vmatpush2.xpose.msra.mxu0 0.0
    %952 = vmatprep.subr.mxu0 0.0
    %953 = vmatpush2.xpose.msra.mxu0 0.0
    %954 = vmatprep.subr.mxu0 0.0
    %955 = vmatpush2.xpose.msra.mxu0 0.0
    %956 = vmatprep.subr.mxu0 0.0
    %957 = vmatpush2.xpose.msra.mxu0 0.0
    %958 = vmatprep.subr.mxu0 0.0
    %959 = vmatpush2.xpose.msra.mxu0 0.0
    %960 = vmatprep.subr.mxu0 0.0
    %961 = vmatpush2.xpose.msra.mxu0 0.0
    %962 = vmatprep.subr.mxu0 0.0
    %963 = vmatpush2.xpose.msra.mxu0 0.0
    %964 = vmatprep.subr.mxu0 0.0
    %965 = vmatpush2.xpose.msra.mxu0 0.0
    %966 = vmatprep.subr.mxu0 0.0
    %967 = vmatpush2.xpose.msra.mxu0 0.0
    %968 = vmatprep.subr.mxu0 0.0
    %969 = vmatpush2.xpose.msra.mxu0 0.0
    %970 = vmatprep.subr.mxu0 0.0
    %971 = vmatpush2.xpose.msra.mxu0 0.0
    %972 = vmatprep.subr.mxu0 0.0
    %973 = vmatpush2.xpose.msra.mxu0 0.0
    %974 = vmatprep.subr.mxu0 0.0
    %975 = vmatpush2.xpose.msra.mxu0 0.0
    %976 = vmatprep.subr.mxu0 0.0
    %977 = vmatpush2.xpose.msra.mxu0 0.0
    %978 = vmatprep.mubr.f32.mxu0 0.0
    %979 = vmatmul.mubr.f32.gmra.mxu0 %v910
    %v980 = vpop.f32.mrf.mxu0
    %v981 = vadd.f32 0.0, %v980
    %v982 = vpop.f32.mrf.mxu0
    %983 = vdwg.mxu0
    %v984 = vsel %vm414, %v832, 0
    %986 = vmatprep.subr.mxu0 0.0
    %987 = vmatpush1.xpose.msra.mxu0 0.0
    %988 = vmatprep.subr.mxu0 0.0
    %989 = vmatpush1.xpose.msra.mxu0 0.0
    %990 = vmatprep.subr.mxu0 0.0
    %991 = vmatpush1.xpose.msra.mxu0 0.0
    %992 = vmatprep.subr.mxu0 0.0
    %993 = vmatpush1.xpose.msra.mxu0 0.0
    %994 = vmatprep.subr.mxu0 0.0
    %995 = vmatpush1.xpose.msra.mxu0 0.0
    %996 = vmatprep.subr.mxu0 0.0
    %997 = vmatpush1.xpose.msra.mxu0 0.0
    %998 = vmatprep.subr.mxu0 0.0
    %999 = vmatpush1.xpose.msra.mxu0 0.0
    %1000 = vmatprep.subr.mxu0 0.0
    %1001 = vmatpush1.xpose.msra.mxu0 0.0
    %1002 = vmatprep.subr.mxu0 0.0
    %1003 = vmatpush1.xpose.msra.mxu0 0.0
    %1004 = vmatprep.subr.mxu0 0.0
    %1005 = vmatpush1.xpose.msra.mxu0 0.0
    %1006 = vmatprep.subr.mxu0 0.0
    %1007 = vmatpush1.xpose.msra.mxu0 0.0
    %1008 = vmatprep.subr.mxu0 0.0
    %1009 = vmatpush1.xpose.msra.mxu0 0.0
    %1010 = vmatprep.subr.mxu0 0.0
    %1011 = vmatpush1.xpose.msra.mxu0 0.0
    %1012 = vmatprep.subr.mxu0 0.0
    %1013 = vmatpush1.xpose.msra.mxu0 0.0
    %1014 = vmatprep.subr.mxu0 0.0
    %1015 = vmatpush1.xpose.msra.mxu0 0.0
    %1016 = vmatprep.subr.mxu0 0.0
    %1017 = vmatpush1.xpose.msra.mxu0 %v984
    %1018 = vmatprep.subr.mxu0 0.0
    %1019 = vmatpush2.xpose.msra.mxu0 0.0
    %1020 = vmatprep.subr.mxu0 0.0
    %1021 = vmatpush2.xpose.msra.mxu0 0.0
    %1022 = vmatprep.subr.mxu0 0.0
    %1023 = vmatpush2.xpose.msra.mxu0 0.0
    %1024 = vmatprep.subr.mxu0 0.0
    %1025 = vmatpush2.xpose.msra.mxu0 0.0
    %1026 = vmatprep.subr.mxu0 0.0
    %1027 = vmatpush2.xpose.msra.mxu0 0.0
    %1028 = vmatprep.subr.mxu0 0.0
    %1029 = vmatpush2.xpose.msra.mxu0 0.0
    %1030 = vmatprep.subr.mxu0 0.0
    %1031 = vmatpush2.xpose.msra.mxu0 0.0
    %1032 = vmatprep.subr.mxu0 0.0
    %1033 = vmatpush2.xpose.msra.mxu0 0.0
    %1034 = vmatprep.subr.mxu0 0.0
    %1035 = vmatpush2.xpose.msra.mxu0 0.0
    %1036 = vmatprep.subr.mxu0 0.0
    %1037 = vmatpush2.xpose.msra.mxu0 0.0
    %1038 = vmatprep.subr.mxu0 0.0
    %1039 = vmatpush2.xpose.msra.mxu0 0.0
    %1040 = vmatprep.subr.mxu0 0.0
    %1041 = vmatpush2.xpose.msra.mxu0 0.0
    %1042 = vmatprep.subr.mxu0 0.0
    %1043 = vmatpush2.xpose.msra.mxu0 0.0
    %1044 = vmatprep.subr.mxu0 0.0
    %1045 = vmatpush2.xpose.msra.mxu0 0.0
    %1046 = vmatprep.subr.mxu0 0.0
    %1047 = vmatpush2.xpose.msra.mxu0 0.0
    %1048 = vmatprep.subr.mxu0 0.0
    %1049 = vmatpush2.xpose.msra.mxu0 0.0
    %1050 = vmatprep.mubr.f32.mxu0 0.0
    %1051 = vmatmul.mubr.f32.gmra.mxu0 %v910
    %v1052 = vpop.f32.mrf.mxu0
    %v1053 = vadd.f32 0.0, %v1052
    %v1054 = vpop.f32.mrf.mxu0
    %1055 = vdwg.mxu0
    %v1056 = vmul.f32 %v981, 0.17677669
    %v1057 = vmul.f32 %v1053, 0.17677669
    %vm1058 = vcmask 31744
    %v1059 = vsel %vm1058, %v1056, -inf
    %1060 = vmax.xlane.f32.xlu0 %v1059
    %v1061 = vpop.xlane.xlu0 %1060
    %v1062 = vsel %vm1058, %v1057, -inf
    %1063 = vmax.xlane.f32.xlu0 %v1062
    %v1064 = vpop.xlane.xlu0 %1063
    %v1065 = vsub.f32 %v1056, %v1061
    %v1066 = vsub.f32 %v1057, %v1064
    %v1067 = vmul.f32 %v1065, 1.442695
    %v1068 = vpow.pop %v1067
    %v1069 = vmul.f32 %v1066, 1.442695
    %v1070 = vpow.pop %v1069
    %v1071 = vsel %vm1058, %v1068, 0.0
    %1072 = vadd.xlane.f32.xlu0 %v1071
    %v1073 = vpop.xlane.xlu0 %1072
    %v1074 = vsel %vm1058, %v1070, 0.0
    %1075 = vadd.xlane.f32.xlu0 %v1074
    %v1076 = vpop.xlane.xlu0 %1075
    %v1077 = vrcp.pop %v1073
    %v1078 = vrcp.pop %v1076
    %v1079 = vmul.f32 %v1068, %v1077
    %v1080 = vmul.f32 %v1070, %v1078
    %v1082 = vsel %vm1058, %v1079, 0
    %vm1084 = vcmask 1043456
    %v1085 = vsel %vm1084, %v904, 0
    %1087 = vmatprep.subr.mxu0 0.0
    %1088 = vmatpush1.msra.mxu0 0.0
    %1089 = vmatprep.subr.mxu0 0.0
    %1090 = vmatpush1.msra.mxu0 0.0
    %1091 = vmatprep.subr.mxu0 0.0
    %1092 = vmatpush1.msra.mxu0 0.0
    %1093 = vmatprep.subr.mxu0 0.0
    %1094 = vmatpush1.msra.mxu0 0.0
    %1095 = vmatprep.subr.mxu0 0.0
    %1096 = vmatpush1.msra.mxu0 0.0
    %1097 = vmatprep.subr.mxu0 0.0
    %1098 = vmatpush1.msra.mxu0 0.0
    %1099 = vmatprep.subr.mxu0 0.0
    %1100 = vmatpush1.msra.mxu0 0.0
    %1101 = vmatprep.subr.mxu0 0.0
    %1102 = vmatpush1.msra.mxu0 0.0
    %1103 = vmatprep.subr.mxu0 0.0
    %1104 = vmatpush1.msra.mxu0 0.0
    %1105 = vmatprep.subr.mxu0 0.0
    %1106 = vmatpush1.msra.mxu0 0.0
    %1107 = vmatprep.subr.mxu0 0.0
    %1108 = vmatpush1.msra.mxu0 0.0
    %1109 = vmatprep.subr.mxu0 0.0
    %1110 = vmatpush1.msra.mxu0 0.0
    %1111 = vmatprep.subr.mxu0 0.0
    %1112 = vmatpush1.msra.mxu0 0.0
    %1113 = vmatprep.subr.mxu0 0.0
    %1114 = vmatpush1.msra.mxu0 0.0
    %1115 = vmatprep.subr.mxu0 0.0
    %1116 = vmatpush1.msra.mxu0 0.0
    %1117 = vmatprep.subr.mxu0 0.0
    %1118 = vmatpush1.msra.mxu0 %v1085
    %1119 = vmatprep.subr.mxu0 0.0
    %1120 = vmatpush2.msra.mxu0 0.0
    %1121 = vmatprep.subr.mxu0 0.0
    %1122 = vmatpush2.msra.mxu0 0.0
    %1123 = vmatprep.subr.mxu0 0.0
    %1124 = vmatpush2.msra.mxu0 0.0
    %1125 = vmatprep.subr.mxu0 0.0
    %1126 = vmatpush2.msra.mxu0 0.0
    %1127 = vmatprep.subr.mxu0 0.0
    %1128 = vmatpush2.msra.mxu0 0.0
    %1129 = vmatprep.subr.mxu0 0.0
    %1130 = vmatpush2.msra.mxu0 0.0
    %1131 = vmatprep.subr.mxu0 0.0
    %1132 = vmatpush2.msra.mxu0 0.0
    %1133 = vmatprep.subr.mxu0 0.0
    %1134 = vmatpush2.msra.mxu0 0.0
    %1135 = vmatprep.subr.mxu0 0.0
    %1136 = vmatpush2.msra.mxu0 0.0
    %1137 = vmatprep.subr.mxu0 0.0
    %1138 = vmatpush2.msra.mxu0 0.0
    %1139 = vmatprep.subr.mxu0 0.0
    %1140 = vmatpush2.msra.mxu0 0.0
    %1141 = vmatprep.subr.mxu0 0.0
    %1142 = vmatpush2.msra.mxu0 0.0
    %1143 = vmatprep.subr.mxu0 0.0
    %1144 = vmatpush2.msra.mxu0 0.0
    %1145 = vmatprep.subr.mxu0 0.0
    %1146 = vmatpush2.msra.mxu0 0.0
    %1147 = vmatprep.subr.mxu0 0.0
    %1148 = vmatpush2.msra.mxu0 0.0
    %1149 = vmatprep.subr.mxu0 0.0
    %1150 = vmatpush2.msra.mxu0 0.0
    %1151 = vmatprep.mubr.f32.mxu0 0.0
    %1152 = vmatmul.mubr.f32.gmra.mxu0 %v1082
    %v1153 = vpop.f32.mrf.mxu0
    %v1154 = vadd.f32 0.0, %v1153
    %v1155 = vpop.f32.mrf.mxu0
    %1156 = vdwg.mxu0
    %v1158 = vsel %vm1058, %v1080, 0
    %v1160 = vsel %vm1084, %v908, 0
    %1162 = vmatprep.subr.mxu0 0.0
    %1163 = vmatpush1.msra.mxu0 0.0
    %1164 = vmatprep.subr.mxu0 0.0
    %1165 = vmatpush1.msra.mxu0 0.0
    %1166 = vmatprep.subr.mxu0 0.0
    %1167 = vmatpush1.msra.mxu0 0.0
    %1168 = vmatprep.subr.mxu0 0.0
    %1169 = vmatpush1.msra.mxu0 0.0
    %1170 = vmatprep.subr.mxu0 0.0
    %1171 = vmatpush1.msra.mxu0 0.0
    %1172 = vmatprep.subr.mxu0 0.0
    %1173 = vmatpush1.msra.mxu0 0.0
    %1174 = vmatprep.subr.mxu0 0.0
    %1175 = vmatpush1.msra.mxu0 0.0
    %1176 = vmatprep.subr.mxu0 0.0
    %1177 = vmatpush1.msra.mxu0 0.0
    %1178 = vmatprep.subr.mxu0 0.0
    %1179 = vmatpush1.msra.mxu0 0.0
    %1180 = vmatprep.subr.mxu0 0.0
    %1181 = vmatpush1.msra.mxu0 0.0
    %1182 = vmatprep.subr.mxu0 0.0
    %1183 = vmatpush1.msra.mxu0 0.0
    %1184 = vmatprep.subr.mxu0 0.0
    %1185 = vmatpush1.msra.mxu0 0.0
    %1186 = vmatprep.subr.mxu0 0.0
    %1187 = vmatpush1.msra.mxu0 0.0
    %1188 = vmatprep.subr.mxu0 0.0
    %1189 = vmatpush1.msra.mxu0 0.0
    %1190 = vmatprep.subr.mxu0 0.0
    %1191 = vmatpush1.msra.mxu0 0.0
    %1192 = vmatprep.subr.mxu0 0.0
    %1193 = vmatpush1.msra.mxu0 %v1160
    %1194 = vmatprep.subr.mxu0 0.0
    %1195 = vmatpush2.msra.mxu0 0.0
    %1196 = vmatprep.subr.mxu0 0.0
    %1197 = vmatpush2.msra.mxu0 0.0
    %1198 = vmatprep.subr.mxu0 0.0
    %1199 = vmatpush2.msra.mxu0 0.0
    %1200 = vmatprep.subr.mxu0 0.0
    %1201 = vmatpush2.msra.mxu0 0.0
    %1202 = vmatprep.subr.mxu0 0.0
    %1203 = vmatpush2.msra.mxu0 0.0
    %1204 = vmatprep.subr.mxu0 0.0
    %1205 = vmatpush2.msra.mxu0 0.0
    %1206 = vmatprep.subr.mxu0 0.0
    %1207 = vmatpush2.msra.mxu0 0.0
    %1208 = vmatprep.subr.mxu0 0.0
    %1209 = vmatpush2.msra.mxu0 0.0
    %1210 = vmatprep.subr.mxu0 0.0
    %1211 = vmatpush2.msra.mxu0 0.0
    %1212 = vmatprep.subr.mxu0 0.0
    %1213 = vmatpush2.msra.mxu0 0.0
    %1214 = vmatprep.subr.mxu0 0.0
    %1215 = vmatpush2.msra.mxu0 0.0
    %1216 = vmatprep.subr.mxu0 0.0
    %1217 = vmatpush2.msra.mxu0 0.0
    %1218 = vmatprep.subr.mxu0 0.0
    %1219 = vmatpush2.msra.mxu0 0.0
    %1220 = vmatprep.subr.mxu0 0.0
    %1221 = vmatpush2.msra.mxu0 0.0
    %1222 = vmatprep.subr.mxu0 0.0
    %1223 = vmatpush2.msra.mxu0 0.0
    %1224 = vmatprep.subr.mxu0 0.0
    %1225 = vmatpush2.msra.mxu0 0.0
    %1226 = vmatprep.mubr.f32.mxu0 0.0
    %1227 = vmatmul.mubr.f32.gmra.mxu0 %v1158
    %v1228 = vpop.f32.mrf.mxu0
    %v1229 = vadd.f32 0.0, %v1228
    %v1230 = vpop.f32.mrf.mxu0
    %1231 = vdwg.mxu0
    %v1232 = vld [vmem:[#allocation14] sm:$0xff]
    %v1233 = vld [vmem:[#allocation14 + $0x8] sm:$0xff]
    %v1234 = vld [vmem:[#allocation14 + $0x10] sm:$0xff]
    %v1235 = vld [vmem:[#allocation14 + $0x18] sm:$0xff]
    %v1237 = vsel %vm414, %v1154, 0
    %v1240 = vsel %vm414, %v1229, 0
    %1242 = vmatprep.subr.mxu0 0.0
    %1243 = vmatpush1.msra.mxu0 0.0
    %1244 = vmatprep.subr.mxu0 0.0
    %1245 = vmatpush1.msra.mxu0 0.0
    %1246 = vmatprep.subr.mxu0 0.0
    %1247 = vmatpush1.msra.mxu0 0.0
    %1248 = vmatprep.subr.mxu0 0.0
    %1249 = vmatpush1.msra.mxu0 0.0
    %1250 = vmatprep.subr.mxu0 0.0
    %1251 = vmatpush1.msra.mxu0 0.0
    %1252 = vmatprep.subr.mxu0 0.0
    %1253 = vmatpush1.msra.mxu0 0.0
    %1254 = vmatprep.subr.mxu0 0.0
    %1255 = vmatpush1.msra.mxu0 0.0
    %1256 = vmatprep.subr.mxu0 0.0
    %1257 = vmatpush1.msra.mxu0 0.0
    %1258 = vmatprep.subr.mxu0 0.0
    %1259 = vmatpush1.msra.mxu0 0.0
    %1260 = vmatprep.subr.mxu0 0.0
    %1261 = vmatpush1.msra.mxu0 0.0
    %1262 = vmatprep.subr.mxu0 0.0
    %1263 = vmatpush1.msra.mxu0 0.0
    %1264 = vmatprep.subr.mxu0 0.0
    %1265 = vmatpush1.msra.mxu0 0.0
    %1266 = vmatprep.subr.mxu0 0.0
    %1267 = vmatpush1.msra.mxu0 %v1235
    %1268 = vmatprep.subr.mxu0 0.0
    %1269 = vmatpush1.msra.mxu0 %v1234
    %1270 = vmatprep.subr.mxu0 0.0
    %1271 = vmatpush1.msra.mxu0 %v1233
    %1272 = vmatprep.subr.mxu0 0.0
    %1273 = vmatpush1.msra.mxu0 %v1232
    %1274 = vmatprep.subr.mxu0 0.0
    %1275 = vmatpush2.msra.mxu0 0.0
    %1276 = vmatprep.subr.mxu0 0.0
    %1277 = vmatpush2.msra.mxu0 0.0
    %1278 = vmatprep.subr.mxu0 0.0
    %1279 = vmatpush2.msra.mxu0 0.0
    %1280 = vmatprep.subr.mxu0 0.0
    %1281 = vmatpush2.msra.mxu0 0.0
    %1282 = vmatprep.subr.mxu0 0.0
    %1283 = vmatpush2.msra.mxu0 0.0
    %1284 = vmatprep.subr.mxu0 0.0
    %1285 = vmatpush2.msra.mxu0 0.0
    %1286 = vmatprep.subr.mxu0 0.0
    %1287 = vmatpush2.msra.mxu0 0.0
    %1288 = vmatprep.subr.mxu0 0.0
    %1289 = vmatpush2.msra.mxu0 0.0
    %1290 = vmatprep.subr.mxu0 0.0
    %1291 = vmatpush2.msra.mxu0 0.0
    %1292 = vmatprep.subr.mxu0 0.0
    %1293 = vmatpush2.msra.mxu0 0.0
    %1294 = vmatprep.subr.mxu0 0.0
    %1295 = vmatpush2.msra.mxu0 0.0
    %1296 = vmatprep.subr.mxu0 0.0
    %1297 = vmatpush2.msra.mxu0 0.0
    %1298 = vmatprep.subr.mxu0 0.0
    %1299 = vmatpush2.msra.mxu0 0.0
    %1300 = vmatprep.subr.mxu0 0.0
    %1301 = vmatpush2.msra.mxu0 0.0
    %1302 = vmatprep.subr.mxu0 0.0
    %1303 = vmatpush2.msra.mxu0 0.0
    %1304 = vmatprep.subr.mxu0 0.0
    %1305 = vmatpush2.msra.mxu0 0.0
    %1306 = vmatprep.mubr.f32.mxu0 0.0
    %1307 = vmatmul.mubr.f32.gmra.mxu0 %v1237
    %v1308 = vpop.f32.mrf.mxu0
    %v1309 = vadd.f32 0.0, %v1308
    %v1310 = vpop.f32.mrf.mxu0
    %1311 = vmatprep.mubr.f32.mxu0 0.0
    %1312 = vmatmul.mubr.f32.gmra.mxu0 %v1240
    %v1313 = vpop.f32.mrf.mxu0
    %v1314 = vadd.f32 0.0, %v1313
    %v1315 = vpop.f32.mrf.mxu0
    %1316 = vdwg.mxu0
    %v1317 = vmul.f32 %v1309, %v1309
    %v1318 = vmul.f32 %v1314, %v1314
    %v1319 = vsel %vm414, %v1317, 0.0
    %1320 = vadd.xlane.f32.xlu0 %v1319
    %v1321 = vpop.xlane.xlu0 %1320
    %v1322 = vsel %vm414, %v1318, 0.0
    %1323 = vadd.xlane.f32.xlu0 %v1322
    %v1324 = vpop.xlane.xlu0 %1323
    %v1325 = vmax.f32 %v1321, 1e-24
    %v1326 = vmax.f32 %v1324, 1e-24
    %v1327 = vrsqrt.pop %v1325
    %v1328 = vrsqrt.pop %v1326
    %v1329 = vmul.f32 %v1309, %v1327
    %v1330 = vmul.f32 %v1314, %v1328
    %v1331 = vmul.f32 %v579, %v1329
    %v1332 = vmul.f32 %v579, %v1330
    %v1333 = vsel %vm414, %v1331, 0.0
    %1334 = vadd.xlane.f32.xlu0 %v1333
    %v1335 = vpop.xlane.xlu0 %1334
    %v1336 = vsel %vm414, %v1332, 0.0
    %1337 = vadd.xlane.f32.xlu0 %v1336
    %v1338 = vpop.xlane.xlu0 %1337
    %v1339 = vmul.f32 %v1335, 14.285714
    %v1340 = vmul.f32 %v1338, 14.285714
    %1342 = vrot.lane.b32.xlu0 %v677, 8
    %v1343 = vpop.permute.xlu0 %1342
    %v1347 = vlaneseq
    %v1348 = vand.u32 %v1347, 127
    %v1349 = vadd.s32 %v1348, 4294967280
    %v1350 = vlaneseq
    %v1351 = vshrl.u32 %v1350, 7
    %v1352 = vsub.s32 %v1349, %v1351
    %v1353 = vrot.slane %v1339, %v1352
    %v1354 = vlaneseq
    %v1355 = vshrl.u32 %v1354, 7
    %v1356 = vsub.s32 %v1349, %v1355
    %v1357 = vrot.slane %v1340, %v1356
    %v1358 = vsel %vm412, %v1357, %v1353
    %vm1360 = vcmask 64512
    %v1361 = vsel %vm1360, %v484, %v1343
    %vm1362 = vcmask 130048
    %v1363 = vsel %vm1362, %v1361, %v1358
    %vm1364 = vcmask 189440
    %1365 = vst.msk [vmem:[%s21] sm:$0x3] %vm1364, %v1363
    %vm1369 = vcmask 1043459
    %v1370 = vsel %vm1369, %v398, %v397
    %vm1372 = vcmask 1041408
    %v1373 = vsel %vm1372, %v413, %v1370
    %v1374 = vpack.c.bf16 %v1373, %v1373
    %v1375 = vld [vmem:[#allocation16] sm:$0xf]
    %v1376 = vld [vmem:[#allocation16 + $0x4] sm:$0xf]
    %v1377 = vld [vmem:[#allocation16 + $0x8] sm:$0xf]
    %v1378 = vld [vmem:[#allocation16 + $0xc] sm:$0xf]
    %v1379 = vld [vmem:[#allocation17] sm:$0x1]
    %v1381 = vlaneseq
    %v1382 = vshrl.u32 %v1381, 7
    %v1383 = vsub.s32 0, %v1382
    %v1384 = vrot.slane %v1379, %v1383
    %v1390 = vunpack.c.l.b16 %v1375
    %v1391 = vunpack.c.l.b16 %v1376
    %v1392 = vunpack.c.l.b16 %v1377
    %v1393 = vunpack.c.l.b16 %v1378
    %v1394 = vpack.c.b16 %v1391, %v1390
    %v1395 = vpack.c.b16 %v1393, %v1392
    %v1399 = vsel %vm414, %v1374, 0
    %1401 = vmatprep.subr.bf16.mxu0 0
    %1402 = vmatpush1.bf16.msra.mxu0 0
    %1403 = vmatprep.subr.bf16.mxu0 0
    %1404 = vmatpush1.bf16.msra.mxu0 0
    %1405 = vmatprep.subr.bf16.mxu0 0
    %1406 = vmatpush1.bf16.msra.mxu0 0
    %1407 = vmatprep.subr.bf16.mxu0 0
    %1408 = vmatpush1.bf16.msra.mxu0 0
    %1409 = vmatprep.subr.bf16.mxu0 0
    %1410 = vmatpush1.bf16.msra.mxu0 0
    %1411 = vmatprep.subr.bf16.mxu0 0
    %1412 = vmatpush1.bf16.msra.mxu0 0
    %1413 = vmatprep.subr.bf16.mxu0 0
    %1414 = vmatpush1.bf16.msra.mxu0 %v1395
    %1415 = vmatprep.subr.bf16.mxu0 0
    %1416 = vmatpush1.bf16.msra.mxu0 %v1394
    %1417 = vmatprep.subr.bf16.mxu0 0
    %1418 = vmatpush2.bf16.msra.mxu0 0
    %1419 = vmatprep.subr.bf16.mxu0 0
    %1420 = vmatpush2.bf16.msra.mxu0 0
    %1421 = vmatprep.subr.bf16.mxu0 0
    %1422 = vmatpush2.bf16.msra.mxu0 0
    %1423 = vmatprep.subr.bf16.mxu0 0
    %1424 = vmatpush2.bf16.msra.mxu0 0
    %1425 = vmatprep.subr.bf16.mxu0 0
    %1426 = vmatpush2.bf16.msra.mxu0 0
    %1427 = vmatprep.subr.bf16.mxu0 0
    %1428 = vmatpush2.bf16.msra.mxu0 0
    %1429 = vmatprep.subr.bf16.mxu0 0
    %1430 = vmatpush2.bf16.msra.mxu0 0
    %1431 = vmatprep.subr.bf16.mxu0 0
    %1432 = vmatpush2.bf16.msra.mxu0 0
    %1433 = vmatprep.mubr.bf16.mxu0 0
    %1434 = vmatmul.mubr.bf16.gmra.mxu0 %v1399
    %v1435 = vpop.f32.mrf.mxu0
    %v1436 = vadd.f32 %v1384, %v1435
    %v1437 = vpop.f32.mrf.mxu0
    %v1438 = vpop.f32.mrf.mxu0
    %v1439 = vpop.f32.mrf.mxu0
    %1440 = vdwg.mxu0
    %v1441 = vmax.f32 %v1436, 0.0
    %v1442 = vpack.c.bf16 %v1441, %v1441
    %v1443 = vld [vmem:[#allocation19] sm:$0xf]
    %v1444 = vld [vmem:[#allocation19 + $0x4] sm:$0xf]
    %v1445 = vld [vmem:[#allocation19 + $0x8] sm:$0xf]
    %v1446 = vld [vmem:[#allocation19 + $0xc] sm:$0xf]
    %v1447 = vld [vmem:[#allocation20] sm:$0x1]
    %v1449 = vlaneseq
    %v1450 = vshrl.u32 %v1449, 7
    %v1451 = vsub.s32 0, %v1450
    %v1452 = vrot.slane %v1447, %v1451
    %v1458 = vunpack.c.l.b16 %v1443
    %v1459 = vunpack.c.l.b16 %v1444
    %v1460 = vunpack.c.l.b16 %v1445
    %v1461 = vunpack.c.l.b16 %v1446
    %v1462 = vpack.c.b16 %v1459, %v1458
    %v1463 = vpack.c.b16 %v1461, %v1460
    %v1467 = vsel %vm414, %v1442, 0
    %1469 = vmatprep.subr.bf16.mxu0 0
    %1470 = vmatpush1.bf16.msra.mxu0 0
    %1471 = vmatprep.subr.bf16.mxu0 0
    %1472 = vmatpush1.bf16.msra.mxu0 0
    %1473 = vmatprep.subr.bf16.mxu0 0
    %1474 = vmatpush1.bf16.msra.mxu0 0
    %1475 = vmatprep.subr.bf16.mxu0 0
    %1476 = vmatpush1.bf16.msra.mxu0 0
    %1477 = vmatprep.subr.bf16.mxu0 0
    %1478 = vmatpush1.bf16.msra.mxu0 0
    %1479 = vmatprep.subr.bf16.mxu0 0
    %1480 = vmatpush1.bf16.msra.mxu0 0
    %1481 = vmatprep.subr.bf16.mxu0 0
    %1482 = vmatpush1.bf16.msra.mxu0 %v1463
    %1483 = vmatprep.subr.bf16.mxu0 0
    %1484 = vmatpush1.bf16.msra.mxu0 %v1462
    %1485 = vmatprep.subr.bf16.mxu0 0
    %1486 = vmatpush2.bf16.msra.mxu0 0
    %1487 = vmatprep.subr.bf16.mxu0 0
    %1488 = vmatpush2.bf16.msra.mxu0 0
    %1489 = vmatprep.subr.bf16.mxu0 0
    %1490 = vmatpush2.bf16.msra.mxu0 0
    %1491 = vmatprep.subr.bf16.mxu0 0
    %1492 = vmatpush2.bf16.msra.mxu0 0
    %1493 = vmatprep.subr.bf16.mxu0 0
    %1494 = vmatpush2.bf16.msra.mxu0 0
    %1495 = vmatprep.subr.bf16.mxu0 0
    %1496 = vmatpush2.bf16.msra.mxu0 0
    %1497 = vmatprep.subr.bf16.mxu0 0
    %1498 = vmatpush2.bf16.msra.mxu0 0
    %1499 = vmatprep.subr.bf16.mxu0 0
    %1500 = vmatpush2.bf16.msra.mxu0 0
    %1501 = vmatprep.mubr.bf16.mxu0 0
    %1502 = vmatmul.mubr.bf16.gmra.mxu0 %v1467
    %v1503 = vpop.f32.mrf.mxu0
    %v1504 = vadd.f32 %v1452, %v1503
    %v1505 = vpop.f32.mrf.mxu0
    %v1506 = vpop.f32.mrf.mxu0
    %v1507 = vpop.f32.mrf.mxu0
    %1508 = vdwg.mxu0
    %v1509 = vmul.f32 %v1504, %v1504
    %v1510 = vsel %vm586, %v1509, 0.0
    %1511 = vadd.xlane.f32.xlu0 %v1510
    %v1512 = vpop.xlane.xlu0 %1511
    %v1513 = vmax.f32 %v1512, 1e-24
    %v1514 = vrsqrt.pop %v1513
    %v1515 = vmul.f32 %v1504, %v1514
    %vm1516 = vcmask 257026
    %v1517 = vsel %vm1516, %v1509, 0.0
    %1518 = vadd.xlane.f32.xlu0 %v1517
    %v1519 = vpop.xlane.xlu0 %1518
    %v1520 = vmax.f32 %v1519, 1e-24
    %v1521 = vrsqrt.pop %v1520
    %v1522 = vmul.f32 %v1504, %v1521
    %v1524 = vrot.slane %v1522, 2
    %v1526 = vmul.f32 %v1515, %v1524
    %v1527 = vsel %vm586, %v1526, 0.0
    %1528 = vadd.xlane.f32.xlu0 %v1527
    %v1529 = vpop.xlane.xlu0 %1528
    %v1530 = vpack.c.bf16 %v1515, %v1515
    %v1531 = vld [vmem:[#allocation22] sm:$0xf]
    %v1532 = vld [vmem:[#allocation22 + $0x4] sm:$0xf]
    %v1533 = vld [vmem:[#allocation22 + $0x8] sm:$0xf]
    %v1534 = vld [vmem:[#allocation22 + $0xc] sm:$0xf]
    %v1539 = vunpack.c.l.b16 %v1531
    %v1540 = vunpack.c.l.b16 %v1532
    %v1541 = vunpack.c.l.b16 %v1533
    %v1542 = vunpack.c.l.b16 %v1534
    %v1543 = vpack.c.b16 %v1540, %v1539
    %v1544 = vpack.c.b16 %v1542, %v1541
    %v1548 = vsel %vm414, %v1530, 0
    %1550 = vmatprep.subr.bf16.mxu0 0
    %1551 = vmatpush1.bf16.msra.mxu0 0
    %1552 = vmatprep.subr.bf16.mxu0 0
    %1553 = vmatpush1.bf16.msra.mxu0 0
    %1554 = vmatprep.subr.bf16.mxu0 0
    %1555 = vmatpush1.bf16.msra.mxu0 0
    %1556 = vmatprep.subr.bf16.mxu0 0
    %1557 = vmatpush1.bf16.msra.mxu0 0
    %1558 = vmatprep.subr.bf16.mxu0 0
    %1559 = vmatpush1.bf16.msra.mxu0 0
    %1560 = vmatprep.subr.bf16.mxu0 0
    %1561 = vmatpush1.bf16.msra.mxu0 0
    %1562 = vmatprep.subr.bf16.mxu0 0
    %1563 = vmatpush1.bf16.msra.mxu0 %v1544
    %1564 = vmatprep.subr.bf16.mxu0 0
    %1565 = vmatpush1.bf16.msra.mxu0 %v1543
    %1566 = vmatprep.subr.bf16.mxu0 0
    %1567 = vmatpush2.bf16.msra.mxu0 0
    %1568 = vmatprep.subr.bf16.mxu0 0
    %1569 = vmatpush2.bf16.msra.mxu0 0
    %1570 = vmatprep.subr.bf16.mxu0 0
    %1571 = vmatpush2.bf16.msra.mxu0 0
    %1572 = vmatprep.subr.bf16.mxu0 0
    %1573 = vmatpush2.bf16.msra.mxu0 0
    %1574 = vmatprep.subr.bf16.mxu0 0
    %1575 = vmatpush2.bf16.msra.mxu0 0
    %1576 = vmatprep.subr.bf16.mxu0 0
    %1577 = vmatpush2.bf16.msra.mxu0 0
    %1578 = vmatprep.subr.bf16.mxu0 0
    %1579 = vmatpush2.bf16.msra.mxu0 0
    %1580 = vmatprep.subr.bf16.mxu0 0
    %1581 = vmatpush2.bf16.msra.mxu0 0
    %1582 = vmatprep.mubr.bf16.mxu0 0
    %1583 = vmatmul.mubr.bf16.gmra.mxu0 %v1548
    %v1584 = vpop.f32.mrf.mxu0
    %v1585 = vadd.f32 0.0, %v1584
    %v1586 = vpop.f32.mrf.mxu0
    %v1587 = vpop.f32.mrf.mxu0
    %v1588 = vpop.f32.mrf.mxu0
    %1589 = vdwg.mxu0
    %v1590 = vld [vmem:[%s2] sm:$0x3]
    %v1591 = vld [vmem:[#allocation5] sm:$0x1]
    %1592 = vset.pattern.permute.xlu0 0
    %1593 = vperm.xlu0 %1592, %v1590
    %v1594 = vpop.permute.xlu0 %1593
    %v1595 = vlaneseq
    %v1596 = vshrl.u32 %v1595, 7
    %v1597 = vsub.s32 0, %v1596
    %v1598 = vrot.slane %v1591, %v1597
    %vm1599 = vcmp.eq.s32.totalorder %v1594, %v1598
    %v1600 = vsel %vm1599, 1, 0
    %v1601 = vcvt.s32.f32 %v1600
    %v1602 = vmul.f32 %v1601, 1e+09
    %v1603 = vsub.f32 %v1585, %v1602
    %v1604 = vmul.f32 %v1529, 14.285714
    %vm1605 = vcmask 1024
    %1606 = vst.msk [vmem:[#allocation23] sm:$0x3] %vm1605, %v1604
    %v1607 = vmul.f32 %v1603, 14.285714
    %v1610 = vunpack.c.l.s4 1983009808
    %v1611 = vunpack.c.0.s8 %v1610
    %v1612 = vlaneseq
    %v1613 = vshrl.u32 %v1612, 7
    %v1614 = vsub.s32 %v1611, %v1613
    %v1615 = vrot.slane %v1607, %v1614
    %1616 = vrot.lane.b32.xlu0 %v1615, 1
    %v1617 = vpop.permute.xlu0 %1616
    %v1618 = vrot.slane %v1617, 6
    %vm1619 = vcmask 7168
    %v1620 = vsel %vm1619, %v1618, %v1617
    %vm1622 = vcmask 1041416
    %vm1623 = vcmask 3074
    %vm1624 = vmor %vm1623, %vm1622
    %1625 = vst.msk [vmem:[#allocation23] sm:$0xf] %vm1624, %v1620
    // Predicated region
    $region134: #{forward.1} parent=1 // pred_check
      _
    $region135: #{forward.1} parent=1 // pred_check_branch
      %1627 = sbr.rel (0) target = $region137
    $region136: #{forward.1} parent=1 // pred_region
      %s1629 = ssub.s32 64, 64
      %1630 = vsyncadd [#allocation4], %s1629
      %s1632 = sshll.u32 [#allocation23], 4
      %s1633 = int_to_ptr.vmem [resolvable:$true] %s1632
      %1635 = dma.vmem_to_hbm [thread:$0]  %s1633, 64, %s20, [#allocation4]
    $region137: #{forward.1} parent=1 // pred_fallthru
      _
    // Predicated region
    $region138: #{forward.1} parent=1 // pred_check
      _
    $region139: #{forward.1} parent=1 // pred_check_branch
      %1637 = sbr.rel (0) target = $region141
    $region140: #{forward.1} parent=1 // pred_region
      _
    $region141: #{forward.1} parent=1 // pred_fallthru
      _
    // Predicated region
    $region142: #{forward.1} parent=1 // pred_check
      _
    $region143: #{forward.1} parent=1 // pred_check_branch
      %1639 = sbr.rel (0) target = $region145
    $region144: #{forward.1} parent=1 // pred_region
      %1640 = dma.done [#allocation4], 64
    $region145: #{forward.1} parent=1 // pred_fallthru
      _
    // Predicated region
    $region146: #{forward.1} parent=1 // pred_check
      _
    $region147: #{forward.1} parent=1 // pred_check_branch
      %1642 = sbr.rel (0) target = $region149
    $region148: #{forward.1} parent=1 // pred_region
      _
    $region149: #{forward.1} parent=1 // pred_fallthru
      _
    %1643 = vsyncpa [#allocation3], 1
    %1644 = vsyncpa [#allocation6], 1
    %1645 = vsyncpa [#allocation9], 1
    %1646 = vsyncpa [#allocation12], 1
    %1647 = vsyncpa [#allocation15], 1
    %1648 = vsyncpa [#allocation18], 1
    %1649 = vsyncpa [#allocation21], 1
    %1650 = vsyncpa [#allocation4], 1

</llo_original>
